<compile_context>
chip_gen: v6e
topology: v6e:2x2x1
jax: 0.10.0
libtpu: 0.0.40
codegen_flags: <defaults>
</compile_context>

<pallas_src>
import functools

import jax
import jax.numpy as jnp
from jax.experimental import pallas as pl
from jax.experimental.pallas import tpu as pltpu


# ----------------------------------------------------------------------------
# Kernel helpers
# ----------------------------------------------------------------------------
def _layernorm_f32(x, gamma, beta, eps=1e-5):
    # two-pass variance (matches nn.LayerNorm numerics; avoids the
    # E[x^2] - mean^2 cancellation flagged in review)
    mean = jnp.mean(x, axis=-1, keepdims=True)
    cent = x - mean
    var = jnp.mean(cent * cent, axis=-1, keepdims=True)
    return cent * jax.lax.rsqrt(var + eps) * gamma + beta


# ----------------------------------------------------------------------------
# Pallas kernel: one grid step == NB batch elements; the whole layer
# (LN -> MHA -> residual -> LN -> FFN -> residual) runs in VMEM.
# ----------------------------------------------------------------------------
def encoder_layer_kernel(src_ref,
                         ln1_g_ref, ln1_b_ref,
                         wqkv_ref, bqkv_ref,
                         wo_ref, bo_ref,
                         ln2_g_ref, ln2_b_ref,
                         w1_ref, b1_ref,
                         w2_ref, b2_ref,
                         out_ref,
                         *, nhead, kv_tile):
    bf16 = jnp.bfloat16
    NB, S, E = src_ref.shape
    H = nhead
    Dh = E // H
    R = NB * S
    scale = 1.0 / float(Dh) ** 0.5

    # (NB, S, E) -> (NB*S, E): leading-dim merge only (pure re-tiling).
    x = src_ref[...].astype(jnp.float32).reshape(R, E)

    # ---------------- self-attention block (pre-norm) ----------------
    h = _layernorm_f32(x, ln1_g_ref[...], ln1_b_ref[...])
    # pre-transposed (E, 3E) bf16 weights; f32 accumulation on the MXU.
    qkv = jnp.dot(h.astype(bf16), wqkv_ref[...],
                  preferred_element_type=jnp.float32) + bqkv_ref[...]   # (R, 3E)
    q = qkv[:, :E] * scale        # fold softmax scale into q (R*Dh work, not S*S)
    k = qkv[:, E:2 * E]
    v = qkv[:, 2 * E:]

    n_kv = pl.cdiv(S, kv_tile)    # static python int

    ctx_rows = []
    for n in range(NB):           # attention never mixes batch elements
        r0 = n * S

        def split_heads(t):
            # (S, E) -> (H, S, Dh) as a *value* (no VMEM scratch round trip).
            # Lane slices become free vreg selections once Dh is a multiple
            # of 128 (prod configs); equivalent to reshape(S,H,Dh)->(H,S,Dh).
            rows = t[r0:r0 + S]
            return jnp.stack(
                [rows[:, hd * Dh:(hd + 1) * Dh] for hd in range(H)],
                axis=0).astype(bf16)

        qh = split_heads(q)
        kh = split_heads(k)
        vh = split_heads(v)

        def score(kt):
            return jnp.einsum('hqd,hkd->hqk', qh, kt,
                              preferred_element_type=jnp.float32)

        # kv-tiled online softmax (flash-style): never materializes the full
        # (H, S, S) f32 score tensor when S > kv_tile.  The first tile
        # initializes the running stats (avoids -inf bookkeeping).
        hi0 = min(S, kv_tile)
        s0 = score(kh[:, :hi0, :])
        m = jnp.max(s0, axis=-1, keepdims=True)
        p0 = jnp.exp(s0 - m)
        l = jnp.sum(p0, axis=-1, keepdims=True)
        acc = jnp.einsum('hqk,hkd->hqd', p0.astype(bf16), vh[:, :hi0, :],
                         preferred_element_type=jnp.float32)
        for t in range(1, n_kv):
            lo = t * kv_tile
            hi = min(S, lo + kv_tile)
            st = score(kh[:, lo:hi, :])
            m_new = jnp.maximum(m, jnp.max(st, axis=-1, keepdims=True))
            alpha = jnp.exp(m - m_new)
            pt = jnp.exp(st - m_new)
            l = alpha * l + jnp.sum(pt, axis=-1, keepdims=True)
            acc = alpha * acc + jnp.einsum('hqk,hkd->hqd', pt.astype(bf16),
                                           vh[:, lo:hi, :],
                                           preferred_element_type=jnp.float32)
            m = m_new

        # normalize once after the PV matmul: H*S*Dh multiplies instead of
        # H*S*S, exact reciprocal (precision note from review).
        ctx = acc * (1.0 / l)                                   # (H, S, Dh) f32
        # merge heads back to (S, E) as a value (no per-head masked slab stores)
        ctx_rows.append(jnp.concatenate([ctx[hd] for hd in range(H)], axis=-1))

    ctx_all = ctx_rows[0] if NB == 1 else jnp.concatenate(ctx_rows, axis=0)

    attn = jnp.dot(ctx_all.astype(bf16), wo_ref[...],
                   preferred_element_type=jnp.float32) + bo_ref[...]
    x = x + attn                   # dropout1 == identity

    # ---------------- feed-forward block (pre-norm) ----------------
    h2 = _layernorm_f32(x, ln2_g_ref[...], ln2_b_ref[...])
    ff = jnp.dot(h2.astype(bf16), w1_ref[...],
                 preferred_element_type=jnp.float32) + b1_ref[...]
    ff = jnp.maximum(ff, 0.0)      # ReLU; dropout == identity
    ff = jnp.dot(ff.astype(bf16), w2_ref[...],
                 preferred_element_type=jnp.float32) + b2_ref[...]
    x = x + ff                     # dropout2 == identity

    out_ref[...] = x.reshape(NB, S, E).astype(out_ref.dtype)


# ----------------------------------------------------------------------------
# Wrapper
# ----------------------------------------------------------------------------
def _pick_batch_block(n_batch, seq_len, target_rows=512, max_block=8):
    """Largest divisor of the batch (capped for unroll size) whose flattened
    row count keeps the MXU M dimension near `target_rows`."""
    nb = 1
    for cand in range(1, min(n_batch, max_block) + 1):
        if n_batch % cand == 0 and cand * seq_len <= max(target_rows, seq_len):
            nb = cand
    return nb


def transformer_encoder_layer(src, params, nhead):
    N, S, E = src.shape
    F = params["l1_w"].shape[0]
    assert E % nhead == 0

    NB = _pick_batch_block(N, S)       # batch elements per grid step
    grid = (N // NB,)                  # NOTE: keep a multiple of 2 on v7x when possible
    kv_tile = min(S, 512)              # kv block for the online softmax

    bf16 = jnp.bfloat16
    # Pre-transpose once on the host side to (in_features, out_features) + bf16.
    wqkv = jnp.asarray(params["in_w"].T, bf16)    # (E, 3E)
    wo = jnp.asarray(params["out_w"].T, bf16)     # (E, E)
    w1 = jnp.asarray(params["l1_w"].T, bf16)      # (E, F)
    w2 = jnp.asarray(params["l2_w"].T, bf16)      # (F, E)

    def row(v):                    # 1-D param -> (1, X) f32, TPU-friendly tile
        return jnp.asarray(v, jnp.float32).reshape(1, -1)

    kernel = functools.partial(encoder_layer_kernel, nhead=nhead, kv_tile=kv_tile)

    def w_spec(shape):
        # grid-invariant weight block (TODO(synk): pl.Buffered(1)/streaming at prod sizes)
        return pl.BlockSpec(shape, lambda b: (0, 0))

    act_spec = pl.BlockSpec((NB, S, E), lambda b: (b, 0, 0))
    out_spec = pl.BlockSpec((NB, S, E), lambda b: (b, 0, 0))

    in_specs = [
        act_spec,                                       # src
        w_spec((1, E)), w_spec((1, E)),                 # ln1 gamma/beta
        w_spec((E, 3 * E)), w_spec((1, 3 * E)),         # in_proj W^T / b
        w_spec((E, E)), w_spec((1, E)),                 # out_proj W^T / b
        w_spec((1, E)), w_spec((1, E)),                 # ln2 gamma/beta
        w_spec((E, F)), w_spec((1, F)),                 # linear1 W^T / b
        w_spec((F, E)), w_spec((1, E)),                 # linear2 W^T / b
    ]

    # Advisory cost estimate for the XLA scheduler.
    flops = int(2 * N * S * (4 * E * E + 2 * E * F) + 4 * N * S * S * E)
    transcendentals = int(N * nhead * S * S + N * nhead * S + 2 * N * S)
    bytes_accessed = int(2 * N * S * E * 4                    # src + out (f32)
                         + (4 * E * E + 2 * E * F) * 2        # bf16 weights
                         + (3 * E + E + F + 5 * E) * 4)       # biases + LN params

    return pl.pallas_call(
        kernel,
        out_shape=jax.ShapeDtypeStruct((N, S, E), src.dtype),
        grid_spec=pltpu.PrefetchScalarGridSpec(
            num_scalar_prefetch=0,
            grid=grid,
            in_specs=in_specs,
            out_specs=out_spec,
        ),
        compiler_params=pltpu.CompilerParams(
            dimension_semantics=("parallel",),
            # above the 16/32 MiB scoped defaults, below every chip's physical
            # VMEM (v7x: 64 MiB per TC).
            vmem_limit_bytes=48 * 1024 * 1024,
        ),
        cost_estimate=pl.CostEstimate(
            flops=flops,
            transcendentals=transcendentals,
            bytes_accessed=bytes_accessed,
        ),
    )(src,
      row(params["ln1_g"]), row(params["ln1_b"]),
      wqkv, row(params["in_b"]),
      wo, row(params["out_b"]),
      row(params["ln2_g"]), row(params["ln2_b"]),
      w1, row(params["l1_b"]),
      w2, row(params["l2_b"]))


# ----------------------------------------------------------------------------
# Pure-JAX f32 reference (PyTorch semantics) for a correctness check
# ----------------------------------------------------------------------------
def reference(src, p, nhead):
    def ln(x, g, b, eps=1e-5):
        m = x.mean(-1, keepdims=True)
        v = ((x - m) ** 2).mean(-1, keepdims=True)
        return (x - m) / jnp.sqrt(v + eps) * g + b

    N, S, E = src.shape
    Dh = E // nhead
    x = src
    h = ln(x, p["ln1_g"], p["ln1_b"])
    qkv = h @ p["in_w"].T + p["in_b"]
    q, k, v = jnp.split(qkv, 3, axis=-1)

    def heads(t):
        return t.reshape(N, S, nhead, Dh).transpose(0, 2, 1, 3)

    qh, kh, vh = heads(q), heads(k), heads(v)
    sc = (qh @ kh.transpose(0, 1, 3, 2)) / jnp.sqrt(jnp.float32(Dh))
    att = jax.nn.softmax(sc, axis=-1)
    o = (att @ vh).transpose(0, 2, 1, 3).reshape(N, S, E)
    o = o @ p["out_w"].T + p["out_b"]
    x = x + o
    h2 = ln(x, p["ln2_g"], p["ln2_b"])
    ff = jax.nn.relu(h2 @ p["l1_w"].T + p["l1_b"])
    ff = ff @ p["l2_w"].T + p["l2_b"]
    return x + ff


# ----------------------------------------------------------------------------
# Main
# ----------------------------------------------------------------------------
if __name__ == "__main__":
    N, S = 2, 8
    d_model, nhead, dim_ff = 32, 4, 64

    key = jax.random.PRNGKey(0)
    keys = jax.random.split(key, 9)

    params = {
        "ln1_g": jnp.ones((d_model,), jnp.float32),
        "ln1_b": jnp.zeros((d_model,), jnp.float32),
        "in_w": 0.05 * jax.random.normal(keys[0], (3 * d_model, d_model), jnp.float32),
        "in_b": 0.01 * jax.random.normal(keys[1], (3 * d_model,), jnp.float32),
        "out_w": 0.05 * jax.random.normal(keys[2], (d_model, d_model), jnp.float32),
        "out_b": 0.01 * jax.random.normal(keys[3], (d_model,), jnp.float32),
        "ln2_g": jnp.ones((d_model,), jnp.float32),
        "ln2_b": jnp.zeros((d_model,), jnp.float32),
        "l1_w": 0.05 * jax.random.normal(keys[4], (dim_ff, d_model), jnp.float32),
        "l1_b": 0.01 * jax.random.normal(keys[5], (dim_ff,), jnp.float32),
        "l2_w": 0.05 * jax.random.normal(keys[6], (d_model, dim_ff), jnp.float32),
        "l2_b": 0.01 * jax.random.normal(keys[7], (d_model,), jnp.float32),
    }

    src = jax.random.normal(keys[8], (N, S, d_model), jnp.float32)

    out = jax.block_until_ready(transformer_encoder_layer(src, params, nhead))
    ref = jax.block_until_ready(reference(src, params, nhead))

    assert out.shape == (N, S, d_model)
    # bf16 MXU operands (f32 accumulation) => looser tolerance
    assert jnp.allclose(out, ref, atol=2e-2, rtol=2e-2), "mismatch vs JAX reference"

    print("KERNEL_OK")
</pallas_src>

<mosaic_0001>
module attributes {stable_mosaic.version = 11 : i64} {
  func.func @encoder_layer_kernel(%arg0: i32, %arg1: memref<2x8x32xf32, #tpu.memory_space<vmem>>, %arg2: memref<1x32xf32, #tpu.memory_space<vmem>>, %arg3: memref<1x32xf32, #tpu.memory_space<vmem>>, %arg4: memref<32x96xbf16, #tpu.memory_space<vmem>>, %arg5: memref<1x96xf32, #tpu.memory_space<vmem>>, %arg6: memref<32x32xbf16, #tpu.memory_space<vmem>>, %arg7: memref<1x32xf32, #tpu.memory_space<vmem>>, %arg8: memref<1x32xf32, #tpu.memory_space<vmem>>, %arg9: memref<1x32xf32, #tpu.memory_space<vmem>>, %arg10: memref<32x64xbf16, #tpu.memory_space<vmem>>, %arg11: memref<1x64xf32, #tpu.memory_space<vmem>>, %arg12: memref<64x32xbf16, #tpu.memory_space<vmem>>, %arg13: memref<1x32xf32, #tpu.memory_space<vmem>>, %arg14: memref<2x8x32xf32, #tpu.memory_space<vmem>>) attributes {dimension_semantics = [#tpu.dimension_semantics<parallel>], iteration_bounds = array<i64: 1>, scalar_prefetch = 0 : i64, scratch_operands = 0 : i64, tpu.core_type = #tpu.core_type<tc>, window_params = [{transform_indices = @transform_0, window_bounds = array<i64: 2, 8, 32>}, {pipeline_mode = #tpu.pipeline_mode<synchronous>, transform_indices = @transform_1, window_bounds = array<i64: 1, 32>}, {pipeline_mode = #tpu.pipeline_mode<synchronous>, transform_indices = @transform_2, window_bounds = array<i64: 1, 32>}, {pipeline_mode = #tpu.pipeline_mode<synchronous>, transform_indices = @transform_3, window_bounds = array<i64: 32, 96>}, {pipeline_mode = #tpu.pipeline_mode<synchronous>, transform_indices = @transform_4, window_bounds = array<i64: 1, 96>}, {pipeline_mode = #tpu.pipeline_mode<synchronous>, transform_indices = @transform_5, window_bounds = array<i64: 32, 32>}, {pipeline_mode = #tpu.pipeline_mode<synchronous>, transform_indices = @transform_6, window_bounds = array<i64: 1, 32>}, {pipeline_mode = #tpu.pipeline_mode<synchronous>, transform_indices = @transform_7, window_bounds = array<i64: 1, 32>}, {pipeline_mode = #tpu.pipeline_mode<synchronous>, transform_indices = @transform_8, window_bounds = array<i64: 1, 32>}, {pipeline_mode = #tpu.pipeline_mode<synchronous>, transform_indices = @transform_9, window_bounds = array<i64: 32, 64>}, {pipeline_mode = #tpu.pipeline_mode<synchronous>, transform_indices = @transform_10, window_bounds = array<i64: 1, 64>}, {pipeline_mode = #tpu.pipeline_mode<synchronous>, transform_indices = @transform_11, window_bounds = array<i64: 64, 32>}, {pipeline_mode = #tpu.pipeline_mode<synchronous>, transform_indices = @transform_12, window_bounds = array<i64: 1, 32>}, {transform_indices = @transform_13, window_bounds = array<i64: 2, 8, 32>}]} {
    %c0 = arith.constant 0 : index
    %c0_0 = arith.constant 0 : index
    %c0_1 = arith.constant 0 : index
    %0 = vector.load %arg1[%c0, %c0_0, %c0_1] : memref<2x8x32xf32, #tpu.memory_space<vmem>>, vector<2x8x32xf32>
    %1 = vector.shape_cast %0 : vector<2x8x32xf32> to vector<16x32xf32>
    %c0_2 = arith.constant 0 : index
    %c0_3 = arith.constant 0 : index
    %2 = vector.load %arg2[%c0_2, %c0_3] : memref<1x32xf32, #tpu.memory_space<vmem>>, vector<1x32xf32>
    %c0_4 = arith.constant 0 : index
    %c0_5 = arith.constant 0 : index
    %3 = vector.load %arg3[%c0_4, %c0_5] : memref<1x32xf32, #tpu.memory_space<vmem>>, vector<1x32xf32>
    %cst = arith.constant dense<0.000000e+00> : vector<16xf32>
    %4 = vector.multi_reduction <add>, %1, %cst [1] : vector<16x32xf32> to vector<16xf32>
    %5 = vector.shape_cast %4 : vector<16xf32> to vector<16x1xf32>
    %cst_6 = arith.constant 3.200000e+01 : f32
    %6 = vector.broadcast %cst_6 : f32 to vector<16x1xf32>
    %7 = arith.divf %5, %6 : vector<16x1xf32>
    %8 = vector.broadcast %7 : vector<16x1xf32> to vector<16x32xf32>
    %9 = arith.subf %1, %8 : vector<16x32xf32>
    %10 = arith.mulf %9, %9 : vector<16x32xf32>
    %cst_7 = arith.constant dense<0.000000e+00> : vector<16xf32>
    %11 = vector.multi_reduction <add>, %10, %cst_7 [1] : vector<16x32xf32> to vector<16xf32>
    %12 = vector.shape_cast %11 : vector<16xf32> to vector<16x1xf32>
    %cst_8 = arith.constant 3.200000e+01 : f32
    %13 = vector.broadcast %cst_8 : f32 to vector<16x1xf32>
    %14 = arith.divf %12, %13 : vector<16x1xf32>
    %cst_9 = arith.constant 9.99999974E-6 : f32
    %15 = vector.broadcast %cst_9 : f32 to vector<16x1xf32>
    %16 = arith.addf %14, %15 : vector<16x1xf32>
    %17 = math.rsqrt %16 : vector<16x1xf32>
    %18 = vector.broadcast %17 : vector<16x1xf32> to vector<16x32xf32>
    %19 = arith.mulf %9, %18 : vector<16x32xf32>
    %20 = vector.broadcast %2 : vector<1x32xf32> to vector<16x32xf32>
    %21 = arith.mulf %19, %20 : vector<16x32xf32>
    %22 = vector.broadcast %3 : vector<1x32xf32> to vector<16x32xf32>
    %23 = arith.addf %21, %22 : vector<16x32xf32>
    %24 = arith.truncf %23 : vector<16x32xf32> to vector<16x32xbf16>
    %c0_10 = arith.constant 0 : index
    %c0_11 = arith.constant 0 : index
    %25 = vector.load %arg4[%c0_10, %c0_11] : memref<32x96xbf16, #tpu.memory_space<vmem>>, vector<32x96xbf16>
    %cst_12 = arith.constant dense<0.000000e+00> : vector<16x96xf32>
    %26 = tpu.matmul %24, %25, %cst_12 {dimension_numbers = #tpu.dot_dimension_numbers<[1], [0], [0], [1], [0, 0, 1, 1], [], []>} : vector<16x32xbf16>, vector<32x96xbf16>, vector<16x96xf32> -> vector<16x96xf32>
    %c0_13 = arith.constant 0 : index
    %c0_14 = arith.constant 0 : index
    %27 = vector.load %arg5[%c0_13, %c0_14] : memref<1x96xf32, #tpu.memory_space<vmem>>, vector<1x96xf32>
    %28 = vector.broadcast %27 : vector<1x96xf32> to vector<16x96xf32>
    %29 = arith.addf %26, %28 : vector<16x96xf32>
    %30 = vector.extract_strided_slice %29 {offsets = [0, 0], sizes = [16, 32], strides = [1, 1]} : vector<16x96xf32> to vector<16x32xf32>
    %cst_15 = arith.constant 0.353553385 : f32
    %31 = vector.broadcast %cst_15 : f32 to vector<16x32xf32>
    %32 = arith.mulf %30, %31 : vector<16x32xf32>
    %33 = vector.extract_strided_slice %29 {offsets = [0, 32], sizes = [16, 32], strides = [1, 1]} : vector<16x96xf32> to vector<16x32xf32>
    %34 = vector.extract_strided_slice %29 {offsets = [0, 64], sizes = [16, 32], strides = [1, 1]} : vector<16x96xf32> to vector<16x32xf32>
    %35 = vector.extract_strided_slice %32 {offsets = [0, 0], sizes = [8, 32], strides = [1, 1]} : vector<16x32xf32> to vector<8x32xf32>
    %36 = vector.extract_strided_slice %35 {offsets = [0, 0], sizes = [8, 8], strides = [1, 1]} : vector<8x32xf32> to vector<8x8xf32>
    %37 = vector.extract_strided_slice %35 {offsets = [0, 8], sizes = [8, 8], strides = [1, 1]} : vector<8x32xf32> to vector<8x8xf32>
    %38 = vector.extract_strided_slice %35 {offsets = [0, 16], sizes = [8, 8], strides = [1, 1]} : vector<8x32xf32> to vector<8x8xf32>
    %39 = vector.extract_strided_slice %35 {offsets = [0, 24], sizes = [8, 8], strides = [1, 1]} : vector<8x32xf32> to vector<8x8xf32>
    %40 = vector.shape_cast %36 : vector<8x8xf32> to vector<1x8x8xf32>
    %41 = vector.shape_cast %37 : vector<8x8xf32> to vector<1x8x8xf32>
    %42 = vector.shape_cast %38 : vector<8x8xf32> to vector<1x8x8xf32>
    %43 = vector.shape_cast %39 : vector<8x8xf32> to vector<1x8x8xf32>
    %44 = tpu.concatenate %40, %41, %42, %43 in 0 : vector<1x8x8xf32>, vector<1x8x8xf32>, vector<1x8x8xf32>, vector<1x8x8xf32> -> vector<4x8x8xf32>
    %45 = arith.truncf %44 : vector<4x8x8xf32> to vector<4x8x8xbf16>
    %46 = vector.extract_strided_slice %33 {offsets = [0, 0], sizes = [8, 32], strides = [1, 1]} : vector<16x32xf32> to vector<8x32xf32>
    %47 = vector.extract_strided_slice %46 {offsets = [0, 0], sizes = [8, 8], strides = [1, 1]} : vector<8x32xf32> to vector<8x8xf32>
    %48 = vector.extract_strided_slice %46 {offsets = [0, 8], sizes = [8, 8], strides = [1, 1]} : vector<8x32xf32> to vector<8x8xf32>
    %49 = vector.extract_strided_slice %46 {offsets = [0, 16], sizes = [8, 8], strides = [1, 1]} : vector<8x32xf32> to vector<8x8xf32>
    %50 = vector.extract_strided_slice %46 {offsets = [0, 24], sizes = [8, 8], strides = [1, 1]} : vector<8x32xf32> to vector<8x8xf32>
    %51 = vector.shape_cast %47 : vector<8x8xf32> to vector<1x8x8xf32>
    %52 = vector.shape_cast %48 : vector<8x8xf32> to vector<1x8x8xf32>
    %53 = vector.shape_cast %49 : vector<8x8xf32> to vector<1x8x8xf32>
    %54 = vector.shape_cast %50 : vector<8x8xf32> to vector<1x8x8xf32>
    %55 = tpu.concatenate %51, %52, %53, %54 in 0 : vector<1x8x8xf32>, vector<1x8x8xf32>, vector<1x8x8xf32>, vector<1x8x8xf32> -> vector<4x8x8xf32>
    %56 = arith.truncf %55 : vector<4x8x8xf32> to vector<4x8x8xbf16>
    %57 = vector.extract_strided_slice %34 {offsets = [0, 0], sizes = [8, 32], strides = [1, 1]} : vector<16x32xf32> to vector<8x32xf32>
    %58 = vector.extract_strided_slice %57 {offsets = [0, 0], sizes = [8, 8], strides = [1, 1]} : vector<8x32xf32> to vector<8x8xf32>
    %59 = vector.extract_strided_slice %57 {offsets = [0, 8], sizes = [8, 8], strides = [1, 1]} : vector<8x32xf32> to vector<8x8xf32>
    %60 = vector.extract_strided_slice %57 {offsets = [0, 16], sizes = [8, 8], strides = [1, 1]} : vector<8x32xf32> to vector<8x8xf32>
    %61 = vector.extract_strided_slice %57 {offsets = [0, 24], sizes = [8, 8], strides = [1, 1]} : vector<8x32xf32> to vector<8x8xf32>
    %62 = vector.shape_cast %58 : vector<8x8xf32> to vector<1x8x8xf32>
    %63 = vector.shape_cast %59 : vector<8x8xf32> to vector<1x8x8xf32>
    %64 = vector.shape_cast %60 : vector<8x8xf32> to vector<1x8x8xf32>
    %65 = vector.shape_cast %61 : vector<8x8xf32> to vector<1x8x8xf32>
    %66 = tpu.concatenate %62, %63, %64, %65 in 0 : vector<1x8x8xf32>, vector<1x8x8xf32>, vector<1x8x8xf32>, vector<1x8x8xf32> -> vector<4x8x8xf32>
    %67 = arith.truncf %66 : vector<4x8x8xf32> to vector<4x8x8xbf16>
    "tpu.trace_start"() <{level = 10 : i32, message = "hqd,hkd->hqk"}> : () -> ()
    %cst_16 = arith.constant dense<0.000000e+00> : vector<4x8x8xf32>
    %68 = tpu.matmul %45, %56, %cst_16 {dimension_numbers = #tpu.dot_dimension_numbers<[2], [2], [1], [1], [0, 0, 0, 1, 1, 1], [0], [0]>} : vector<4x8x8xbf16>, vector<4x8x8xbf16>, vector<4x8x8xf32> -> vector<4x8x8xf32>
    "tpu.trace_stop"() : () -> ()
    %cst_17 = arith.constant dense<0xFF800000> : vector<4x8xf32>
    %69 = vector.multi_reduction <maximumf>, %68, %cst_17 [2] : vector<4x8x8xf32> to vector<4x8xf32>
    %70 = vector.shape_cast %69 : vector<4x8xf32> to vector<4x8x1xf32>
    %71 = vector.broadcast %70 : vector<4x8x1xf32> to vector<4x8x8xf32>
    %72 = arith.subf %68, %71 : vector<4x8x8xf32>
    %73 = math.exp %72 : vector<4x8x8xf32>
    %cst_18 = arith.constant dense<0.000000e+00> : vector<4x8xf32>
    %74 = vector.multi_reduction <add>, %73, %cst_18 [2] : vector<4x8x8xf32> to vector<4x8xf32>
    %75 = vector.shape_cast %74 : vector<4x8xf32> to vector<4x8x1xf32>
    %76 = arith.truncf %73 : vector<4x8x8xf32> to vector<4x8x8xbf16>
    "tpu.trace_start"() <{level = 10 : i32, message = "hqk,hkd->hqd"}> : () -> ()
    %cst_19 = arith.constant dense<0.000000e+00> : vector<4x8x8xf32>
    %77 = tpu.matmul %76, %67, %cst_19 {dimension_numbers = #tpu.dot_dimension_numbers<[2], [1], [1], [2], [0, 0, 0, 1, 1, 2], [0], [0]>} : vector<4x8x8xbf16>, vector<4x8x8xbf16>, vector<4x8x8xf32> -> vector<4x8x8xf32>
    "tpu.trace_stop"() : () -> ()
    %cst_20 = arith.constant 1.000000e+00 : f32
    %78 = vector.broadcast %cst_20 : f32 to vector<4x8x1xf32>
    %79 = arith.divf %78, %75 : vector<4x8x1xf32>
    %80 = vector.broadcast %79 : vector<4x8x1xf32> to vector<4x8x8xf32>
    %81 = arith.mulf %77, %80 : vector<4x8x8xf32>
    %82 = vector.extract_strided_slice %81 {offsets = [0, 0, 0], sizes = [1, 8, 8], strides = [1, 1, 1]} : vector<4x8x8xf32> to vector<1x8x8xf32>
    %83 = vector.shape_cast %82 : vector<1x8x8xf32> to vector<8x8xf32>
    %84 = vector.extract_strided_slice %81 {offsets = [1, 0, 0], sizes = [1, 8, 8], strides = [1, 1, 1]} : vector<4x8x8xf32> to vector<1x8x8xf32>
    %85 = vector.shape_cast %84 : vector<1x8x8xf32> to vector<8x8xf32>
    %86 = vector.extract_strided_slice %81 {offsets = [2, 0, 0], sizes = [1, 8, 8], strides = [1, 1, 1]} : vector<4x8x8xf32> to vector<1x8x8xf32>
    %87 = vector.shape_cast %86 : vector<1x8x8xf32> to vector<8x8xf32>
    %88 = vector.extract_strided_slice %81 {offsets = [3, 0, 0], sizes = [1, 8, 8], strides = [1, 1, 1]} : vector<4x8x8xf32> to vector<1x8x8xf32>
    %89 = vector.shape_cast %88 : vector<1x8x8xf32> to vector<8x8xf32>
    %90 = tpu.concatenate %83, %85, %87, %89 in 1 : vector<8x8xf32>, vector<8x8xf32>, vector<8x8xf32>, vector<8x8xf32> -> vector<8x32xf32>
    %91 = vector.extract_strided_slice %32 {offsets = [8, 0], sizes = [8, 32], strides = [1, 1]} : vector<16x32xf32> to vector<8x32xf32>
    %92 = vector.extract_strided_slice %91 {offsets = [0, 0], sizes = [8, 8], strides = [1, 1]} : vector<8x32xf32> to vector<8x8xf32>
    %93 = vector.extract_strided_slice %91 {offsets = [0, 8], sizes = [8, 8], strides = [1, 1]} : vector<8x32xf32> to vector<8x8xf32>
    %94 = vector.extract_strided_slice %91 {offsets = [0, 16], sizes = [8, 8], strides = [1, 1]} : vector<8x32xf32> to vector<8x8xf32>
    %95 = vector.extract_strided_slice %91 {offsets = [0, 24], sizes = [8, 8], strides = [1, 1]} : vector<8x32xf32> to vector<8x8xf32>
    %96 = vector.shape_cast %92 : vector<8x8xf32> to vector<1x8x8xf32>
    %97 = vector.shape_cast %93 : vector<8x8xf32> to vector<1x8x8xf32>
    %98 = vector.shape_cast %94 : vector<8x8xf32> to vector<1x8x8xf32>
    %99 = vector.shape_cast %95 : vector<8x8xf32> to vector<1x8x8xf32>
    %100 = tpu.concatenate %96, %97, %98, %99 in 0 : vector<1x8x8xf32>, vector<1x8x8xf32>, vector<1x8x8xf32>, vector<1x8x8xf32> -> vector<4x8x8xf32>
    %101 = arith.truncf %100 : vector<4x8x8xf32> to vector<4x8x8xbf16>
    %102 = vector.extract_strided_slice %33 {offsets = [8, 0], sizes = [8, 32], strides = [1, 1]} : vector<16x32xf32> to vector<8x32xf32>
    %103 = vector.extract_strided_slice %102 {offsets = [0, 0], sizes = [8, 8], strides = [1, 1]} : vector<8x32xf32> to vector<8x8xf32>
    %104 = vector.extract_strided_slice %102 {offsets = [0, 8], sizes = [8, 8], strides = [1, 1]} : vector<8x32xf32> to vector<8x8xf32>
    %105 = vector.extract_strided_slice %102 {offsets = [0, 16], sizes = [8, 8], strides = [1, 1]} : vector<8x32xf32> to vector<8x8xf32>
    %106 = vector.extract_strided_slice %102 {offsets = [0, 24], sizes = [8, 8], strides = [1, 1]} : vector<8x32xf32> to vector<8x8xf32>
    %107 = vector.shape_cast %103 : vector<8x8xf32> to vector<1x8x8xf32>
    %108 = vector.shape_cast %104 : vector<8x8xf32> to vector<1x8x8xf32>
    %109 = vector.shape_cast %105 : vector<8x8xf32> to vector<1x8x8xf32>
    %110 = vector.shape_cast %106 : vector<8x8xf32> to vector<1x8x8xf32>
    %111 = tpu.concatenate %107, %108, %109, %110 in 0 : vector<1x8x8xf32>, vector<1x8x8xf32>, vector<1x8x8xf32>, vector<1x8x8xf32> -> vector<4x8x8xf32>
    %112 = arith.truncf %111 : vector<4x8x8xf32> to vector<4x8x8xbf16>
    %113 = vector.extract_strided_slice %34 {offsets = [8, 0], sizes = [8, 32], strides = [1, 1]} : vector<16x32xf32> to vector<8x32xf32>
    %114 = vector.extract_strided_slice %113 {offsets = [0, 0], sizes = [8, 8], strides = [1, 1]} : vector<8x32xf32> to vector<8x8xf32>
    %115 = vector.extract_strided_slice %113 {offsets = [0, 8], sizes = [8, 8], strides = [1, 1]} : vector<8x32xf32> to vector<8x8xf32>
    %116 = vector.extract_strided_slice %113 {offsets = [0, 16], sizes = [8, 8], strides = [1, 1]} : vector<8x32xf32> to vector<8x8xf32>
    %117 = vector.extract_strided_slice %113 {offsets = [0, 24], sizes = [8, 8], strides = [1, 1]} : vector<8x32xf32> to vector<8x8xf32>
    %118 = vector.shape_cast %114 : vector<8x8xf32> to vector<1x8x8xf32>
    %119 = vector.shape_cast %115 : vector<8x8xf32> to vector<1x8x8xf32>
    %120 = vector.shape_cast %116 : vector<8x8xf32> to vector<1x8x8xf32>
    %121 = vector.shape_cast %117 : vector<8x8xf32> to vector<1x8x8xf32>
    %122 = tpu.concatenate %118, %119, %120, %121 in 0 : vector<1x8x8xf32>, vector<1x8x8xf32>, vector<1x8x8xf32>, vector<1x8x8xf32> -> vector<4x8x8xf32>
    %123 = arith.truncf %122 : vector<4x8x8xf32> to vector<4x8x8xbf16>
    "tpu.trace_start"() <{level = 10 : i32, message = "hqd,hkd->hqk"}> : () -> ()
    %cst_21 = arith.constant dense<0.000000e+00> : vector<4x8x8xf32>
    %124 = tpu.matmul %101, %112, %cst_21 {dimension_numbers = #tpu.dot_dimension_numbers<[2], [2], [1], [1], [0, 0, 0, 1, 1, 1], [0], [0]>} : vector<4x8x8xbf16>, vector<4x8x8xbf16>, vector<4x8x8xf32> -> vector<4x8x8xf32>
    "tpu.trace_stop"() : () -> ()
    %cst_22 = arith.constant dense<0xFF800000> : vector<4x8xf32>
    %125 = vector.multi_reduction <maximumf>, %124, %cst_22 [2] : vector<4x8x8xf32> to vector<4x8xf32>
    %126 = vector.shape_cast %125 : vector<4x8xf32> to vector<4x8x1xf32>
    %127 = vector.broadcast %126 : vector<4x8x1xf32> to vector<4x8x8xf32>
    %128 = arith.subf %124, %127 : vector<4x8x8xf32>
    %129 = math.exp %128 : vector<4x8x8xf32>
    %cst_23 = arith.constant dense<0.000000e+00> : vector<4x8xf32>
    %130 = vector.multi_reduction <add>, %129, %cst_23 [2] : vector<4x8x8xf32> to vector<4x8xf32>
    %131 = vector.shape_cast %130 : vector<4x8xf32> to vector<4x8x1xf32>
    %132 = arith.truncf %129 : vector<4x8x8xf32> to vector<4x8x8xbf16>
    "tpu.trace_start"() <{level = 10 : i32, message = "hqk,hkd->hqd"}> : () -> ()
    %cst_24 = arith.constant dense<0.000000e+00> : vector<4x8x8xf32>
    %133 = tpu.matmul %132, %123, %cst_24 {dimension_numbers = #tpu.dot_dimension_numbers<[2], [1], [1], [2], [0, 0, 0, 1, 1, 2], [0], [0]>} : vector<4x8x8xbf16>, vector<4x8x8xbf16>, vector<4x8x8xf32> -> vector<4x8x8xf32>
    "tpu.trace_stop"() : () -> ()
    %cst_25 = arith.constant 1.000000e+00 : f32
    %134 = vector.broadcast %cst_25 : f32 to vector<4x8x1xf32>
    %135 = arith.divf %134, %131 : vector<4x8x1xf32>
    %136 = vector.broadcast %135 : vector<4x8x1xf32> to vector<4x8x8xf32>
    %137 = arith.mulf %133, %136 : vector<4x8x8xf32>
    %138 = vector.extract_strided_slice %137 {offsets = [0, 0, 0], sizes = [1, 8, 8], strides = [1, 1, 1]} : vector<4x8x8xf32> to vector<1x8x8xf32>
    %139 = vector.shape_cast %138 : vector<1x8x8xf32> to vector<8x8xf32>
    %140 = vector.extract_strided_slice %137 {offsets = [1, 0, 0], sizes = [1, 8, 8], strides = [1, 1, 1]} : vector<4x8x8xf32> to vector<1x8x8xf32>
    %141 = vector.shape_cast %140 : vector<1x8x8xf32> to vector<8x8xf32>
    %142 = vector.extract_strided_slice %137 {offsets = [2, 0, 0], sizes = [1, 8, 8], strides = [1, 1, 1]} : vector<4x8x8xf32> to vector<1x8x8xf32>
    %143 = vector.shape_cast %142 : vector<1x8x8xf32> to vector<8x8xf32>
    %144 = vector.extract_strided_slice %137 {offsets = [3, 0, 0], sizes = [1, 8, 8], strides = [1, 1, 1]} : vector<4x8x8xf32> to vector<1x8x8xf32>
    %145 = vector.shape_cast %144 : vector<1x8x8xf32> to vector<8x8xf32>
    %146 = tpu.concatenate %139, %141, %143, %145 in 1 : vector<8x8xf32>, vector<8x8xf32>, vector<8x8xf32>, vector<8x8xf32> -> vector<8x32xf32>
    %147 = tpu.concatenate %90, %146 in 0 : vector<8x32xf32>, vector<8x32xf32> -> vector<16x32xf32>
    %148 = arith.truncf %147 : vector<16x32xf32> to vector<16x32xbf16>
    %c0_26 = arith.constant 0 : index
    %c0_27 = arith.constant 0 : index
    %149 = vector.load %arg6[%c0_26, %c0_27] : memref<32x32xbf16, #tpu.memory_space<vmem>>, vector<32x32xbf16>
    %cst_28 = arith.constant dense<0.000000e+00> : vector<16x32xf32>
    %150 = tpu.matmul %148, %149, %cst_28 {dimension_numbers = #tpu.dot_dimension_numbers<[1], [0], [0], [1], [0, 0, 1, 1], [], []>} : vector<16x32xbf16>, vector<32x32xbf16>, vector<16x32xf32> -> vector<16x32xf32>
    %c0_29 = arith.constant 0 : index
    %c0_30 = arith.constant 0 : index
    %151 = vector.load %arg7[%c0_29, %c0_30] : memref<1x32xf32, #tpu.memory_space<vmem>>, vector<1x32xf32>
    %152 = vector.broadcast %151 : vector<1x32xf32> to vector<16x32xf32>
    %153 = arith.addf %150, %152 : vector<16x32xf32>
    %154 = arith.addf %1, %153 : vector<16x32xf32>
    %c0_31 = arith.constant 0 : index
    %c0_32 = arith.constant 0 : index
    %155 = vector.load %arg8[%c0_31, %c0_32] : memref<1x32xf32, #tpu.memory_space<vmem>>, vector<1x32xf32>
    %c0_33 = arith.constant 0 : index
    %c0_34 = arith.constant 0 : index
    %156 = vector.load %arg9[%c0_33, %c0_34] : memref<1x32xf32, #tpu.memory_space<vmem>>, vector<1x32xf32>
    %cst_35 = arith.constant dense<0.000000e+00> : vector<16xf32>
    %157 = vector.multi_reduction <add>, %154, %cst_35 [1] : vector<16x32xf32> to vector<16xf32>
    %158 = vector.shape_cast %157 : vector<16xf32> to vector<16x1xf32>
    %cst_36 = arith.constant 3.200000e+01 : f32
    %159 = vector.broadcast %cst_36 : f32 to vector<16x1xf32>
    %160 = arith.divf %158, %159 : vector<16x1xf32>
    %161 = vector.broadcast %160 : vector<16x1xf32> to vector<16x32xf32>
    %162 = arith.subf %154, %161 : vector<16x32xf32>
    %163 = arith.mulf %162, %162 : vector<16x32xf32>
    %cst_37 = arith.constant dense<0.000000e+00> : vector<16xf32>
    %164 = vector.multi_reduction <add>, %163, %cst_37 [1] : vector<16x32xf32> to vector<16xf32>
    %165 = vector.shape_cast %164 : vector<16xf32> to vector<16x1xf32>
    %cst_38 = arith.constant 3.200000e+01 : f32
    %166 = vector.broadcast %cst_38 : f32 to vector<16x1xf32>
    %167 = arith.divf %165, %166 : vector<16x1xf32>
    %cst_39 = arith.constant 9.99999974E-6 : f32
    %168 = vector.broadcast %cst_39 : f32 to vector<16x1xf32>
    %169 = arith.addf %167, %168 : vector<16x1xf32>
    %170 = math.rsqrt %169 : vector<16x1xf32>
    %171 = vector.broadcast %170 : vector<16x1xf32> to vector<16x32xf32>
    %172 = arith.mulf %162, %171 : vector<16x32xf32>
    %173 = vector.broadcast %155 : vector<1x32xf32> to vector<16x32xf32>
    %174 = arith.mulf %172, %173 : vector<16x32xf32>
    %175 = vector.broadcast %156 : vector<1x32xf32> to vector<16x32xf32>
    %176 = arith.addf %174, %175 : vector<16x32xf32>
    %177 = arith.truncf %176 : vector<16x32xf32> to vector<16x32xbf16>
    %c0_40 = arith.constant 0 : index
    %c0_41 = arith.constant 0 : index
    %178 = vector.load %arg10[%c0_40, %c0_41] : memref<32x64xbf16, #tpu.memory_space<vmem>>, vector<32x64xbf16>
    %cst_42 = arith.constant dense<0.000000e+00> : vector<16x64xf32>
    %179 = tpu.matmul %177, %178, %cst_42 {dimension_numbers = #tpu.dot_dimension_numbers<[1], [0], [0], [1], [0, 0, 1, 1], [], []>} : vector<16x32xbf16>, vector<32x64xbf16>, vector<16x64xf32> -> vector<16x64xf32>
    %c0_43 = arith.constant 0 : index
    %c0_44 = arith.constant 0 : index
    %180 = vector.load %arg11[%c0_43, %c0_44] : memref<1x64xf32, #tpu.memory_space<vmem>>, vector<1x64xf32>
    %181 = vector.broadcast %180 : vector<1x64xf32> to vector<16x64xf32>
    %182 = arith.addf %179, %181 : vector<16x64xf32>
    %cst_45 = arith.constant 0.000000e+00 : f32
    %183 = vector.broadcast %cst_45 : f32 to vector<16x64xf32>
    %184 = arith.maximumf %182, %183 : vector<16x64xf32>
    %185 = arith.truncf %184 : vector<16x64xf32> to vector<16x64xbf16>
    %c0_46 = arith.constant 0 : index
    %c0_47 = arith.constant 0 : index
    %186 = vector.load %arg12[%c0_46, %c0_47] : memref<64x32xbf16, #tpu.memory_space<vmem>>, vector<64x32xbf16>
    %cst_48 = arith.constant dense<0.000000e+00> : vector<16x32xf32>
    %187 = tpu.matmul %185, %186, %cst_48 {dimension_numbers = #tpu.dot_dimension_numbers<[1], [0], [0], [1], [0, 0, 1, 1], [], []>} : vector<16x64xbf16>, vector<64x32xbf16>, vector<16x32xf32> -> vector<16x32xf32>
    %c0_49 = arith.constant 0 : index
    %c0_50 = arith.constant 0 : index
    %188 = vector.load %arg13[%c0_49, %c0_50] : memref<1x32xf32, #tpu.memory_space<vmem>>, vector<1x32xf32>
    %189 = vector.broadcast %188 : vector<1x32xf32> to vector<16x32xf32>
    %190 = arith.addf %187, %189 : vector<16x32xf32>
    %191 = arith.addf %154, %190 : vector<16x32xf32>
    %192 = vector.shape_cast %191 : vector<16x32xf32> to vector<2x8x32xf32>
    %c0_51 = arith.constant 0 : index
    %c0_52 = arith.constant 0 : index
    %c0_53 = arith.constant 0 : index
    %193 = vector.load %arg14[%c0_51, %c0_52, %c0_53] : memref<2x8x32xf32, #tpu.memory_space<vmem>>, vector<2x8x32xf32>
    tpu.vector_store %arg14[%c0_51, %c0_52, %c0_53], %192 {strides = array<i32>} : memref<2x8x32xf32, #tpu.memory_space<vmem>>, vector<2x8x32xf32>,
    return
  }
  func.func @transform_0(%arg0: i32) -> (i32, i32, i32) {
    %c0_i32 = arith.constant 0 : i32
    %c0_i32_0 = arith.constant 0 : i32
    %c0_i32_1 = arith.constant 0 : i32
    return %arg0, %c0_i32, %c0_i32_0 : i32, i32, i32
  }
  func.func @transform_1(%arg0: i32) -> (i32, i32) {
    %c0_i32 = arith.constant 0 : i32
    %c0_i32_0 = arith.constant 0 : i32
    %c0_i32_1 = arith.constant 0 : i32
    return %c0_i32, %c0_i32_0 : i32, i32
  }
  func.func @transform_2(%arg0: i32) -> (i32, i32) {
    %c0_i32 = arith.constant 0 : i32
    %c0_i32_0 = arith.constant 0 : i32
    %c0_i32_1 = arith.constant 0 : i32
    return %c0_i32, %c0_i32_0 : i32, i32
  }
  func.func @transform_3(%arg0: i32) -> (i32, i32) {
    %c0_i32 = arith.constant 0 : i32
    %c0_i32_0 = arith.constant 0 : i32
    %c0_i32_1 = arith.constant 0 : i32
    return %c0_i32, %c0_i32_0 : i32, i32
  }
  func.func @transform_4(%arg0: i32) -> (i32, i32) {
    %c0_i32 = arith.constant 0 : i32
    %c0_i32_0 = arith.constant 0 : i32
    %c0_i32_1 = arith.constant 0 : i32
    return %c0_i32, %c0_i32_0 : i32, i32
  }
  func.func @transform_5(%arg0: i32) -> (i32, i32) {
    %c0_i32 = arith.constant 0 : i32
    %c0_i32_0 = arith.constant 0 : i32
    %c0_i32_1 = arith.constant 0 : i32
    return %c0_i32, %c0_i32_0 : i32, i32
  }
  func.func @transform_6(%arg0: i32) -> (i32, i32) {
    %c0_i32 = arith.constant 0 : i32
    %c0_i32_0 = arith.constant 0 : i32
    %c0_i32_1 = arith.constant 0 : i32
    return %c0_i32, %c0_i32_0 : i32, i32
  }
  func.func @transform_7(%arg0: i32) -> (i32, i32) {
    %c0_i32 = arith.constant 0 : i32
    %c0_i32_0 = arith.constant 0 : i32
    %c0_i32_1 = arith.constant 0 : i32
    return %c0_i32, %c0_i32_0 : i32, i32
  }
  func.func @transform_8(%arg0: i32) -> (i32, i32) {
    %c0_i32 = arith.constant 0 : i32
    %c0_i32_0 = arith.constant 0 : i32
    %c0_i32_1 = arith.constant 0 : i32
    return %c0_i32, %c0_i32_0 : i32, i32
  }
  func.func @transform_9(%arg0: i32) -> (i32, i32) {
    %c0_i32 = arith.constant 0 : i32
    %c0_i32_0 = arith.constant 0 : i32
    %c0_i32_1 = arith.constant 0 : i32
    return %c0_i32, %c0_i32_0 : i32, i32
  }
  func.func @transform_10(%arg0: i32) -> (i32, i32) {
    %c0_i32 = arith.constant 0 : i32
    %c0_i32_0 = arith.constant 0 : i32
    %c0_i32_1 = arith.constant 0 : i32
    return %c0_i32, %c0_i32_0 : i32, i32
  }
  func.func @transform_11(%arg0: i32) -> (i32, i32) {
    %c0_i32 = arith.constant 0 : i32
    %c0_i32_0 = arith.constant 0 : i32
    %c0_i32_1 = arith.constant 0 : i32
    return %c0_i32, %c0_i32_0 : i32, i32
  }
  func.func @transform_12(%arg0: i32) -> (i32, i32) {
    %c0_i32 = arith.constant 0 : i32
    %c0_i32_0 = arith.constant 0 : i32
    %c0_i32_1 = arith.constant 0 : i32
    return %c0_i32, %c0_i32_0 : i32, i32
  }
  func.func @transform_13(%arg0: i32) -> (i32, i32, i32) {
    %c0_i32 = arith.constant 0 : i32
    %c0_i32_0 = arith.constant 0 : i32
    %c0_i32_1 = arith.constant 0 : i32
    return %arg0, %c0_i32, %c0_i32_0 : i32, i32, i32
  }
}

</mosaic_0001>

<llo_original>
// kernel: tpu_custom_call.1
$region0: #{tpu_custom_call.1}
  #allocation0 [shape = 'u32[]', space=smem, size = 0x4, offset = 0x4, fixed_abs, tag = 'smem constant byte address 0x4 - core index']
  #allocation1 [shape = 'u32[144,128]{1,0:T(1,128)}', space=vmem, size = 0x12000, scoped, tag = 'internal scratch']
  %s0 = inlined_call_operand.vmem [shape: f32[2,8,32], index: 0, kind: input, shape index: {}]
  %s1 = inlined_call_operand.vmem [shape: f32[1,32], index: 1, kind: input, shape index: {}]
  %s2 = inlined_call_operand.vmem [shape: f32[1,32], index: 2, kind: input, shape index: {}]
  %s3 = inlined_call_operand.vmem [shape: bf16[32,96], index: 3, kind: input, shape index: {}]
  %s4 = inlined_call_operand.vmem [shape: f32[1,96], index: 4, kind: input, shape index: {}]
  %s5 = inlined_call_operand.vmem [shape: bf16[32,32], index: 5, kind: input, shape index: {}]
  %s6 = inlined_call_operand.vmem [shape: f32[1,32], index: 6, kind: input, shape index: {}]
  %s7 = inlined_call_operand.hbm [shape: f32[1,32], index: 7, kind: input, shape index: {}]
  %s8 = inlined_call_operand.hbm [shape: f32[1,32], index: 8, kind: input, shape index: {}]
  %s9 = inlined_call_operand.hbm [shape: bf16[32,64], index: 9, kind: input, shape index: {}]
  %s10 = inlined_call_operand.hbm [shape: f32[1,64], index: 10, kind: input, shape index: {}]
  %s11 = inlined_call_operand.vmem [shape: bf16[64,32], index: 11, kind: input, shape index: {}]
  %s12 = inlined_call_operand.vmem [shape: f32[1,32], index: 12, kind: input, shape index: {}]
  %s13 = inlined_call_operand.hbm [shape: f32[2,8,32], index: 13, kind: output, shape index: {}]
  %s14 = sld [smem:[#allocation0]]
  $region78: #{tpu_custom_call.1} parent=0
    _
  %s16 = ssub.s32 1, %s14
  %s17 = scalar_select 0, %s16, %s14
  $region1: #{tpu_custom_call.1} parent=0
    #allocation2 [shape = 'u8[512]{0}', space=vmem, size = 0x400, scoped, tag = 'input window, operand 7, single buffered']
    #allocation3 [shape = 's32[1]{0}', space=sflag, size = 0x4, scoped, tag = 'scoped memory for tpu_custom_call.1']
    #allocation4 [shape = 's32[1]{0}', space=sflag, size = 0x4, scoped, tag = 'scoped memory for tpu_custom_call.1']
    #allocation5 [shape = 'u8[512]{0}', space=vmem, size = 0x400, scoped, tag = 'input window, operand 8, single buffered']
    #allocation6 [shape = 's32[1]{0}', space=sflag, size = 0x4, scoped, tag = 'scoped memory for tpu_custom_call.1']
    #allocation7 [shape = 'u8[8192]{0}', space=vmem, size = 0x2000, scoped, tag = 'input window, operand 9, single buffered']
    #allocation8 [shape = 'u8[512]{0}', space=vmem, size = 0x400, scoped, tag = 'input window, operand 10, single buffered']
    #allocation9 [shape = 's32[1]{0}', space=sflag, size = 0x4, scoped, tag = 'scoped memory for tpu_custom_call.1']
    #allocation10 [shape = 'u8[8192]{0}', space=vmem, size = 0x2000, scoped, tag = 'output window, operand 0, single buffered']
    %18 = vsyncpa [#allocation3], 0
    %19 = vsyncpa [#allocation6], 0
    %20 = vsyncpa [#allocation9], 0
    %21 = vsyncpa [#allocation4], 0
    // Predicated region
    $region2: #{tpu_custom_call.1} parent=1 // pred_check
      _
    $region3: #{tpu_custom_call.1} parent=1 // pred_check_branch
      %23 = sbr.rel (0) target = $region5
    $region4: #{tpu_custom_call.1} parent=1 // pred_region
      _
    $region5: #{tpu_custom_call.1} parent=1 // pred_fallthru
      _
    // Predicated region
    $region6: #{tpu_custom_call.1} parent=1 // pred_check
      _
    $region7: #{tpu_custom_call.1} parent=1 // pred_check_branch
      %25 = sbr.rel (0) target = $region9
    $region8: #{tpu_custom_call.1} parent=1 // pred_region
      _
    $region9: #{tpu_custom_call.1} parent=1 // pred_fallthru
      _
    // Predicated region
    $region10: #{tpu_custom_call.1} parent=1 // pred_check
      _
    $region11: #{tpu_custom_call.1} parent=1 // pred_check_branch
      %27 = sbr.rel (0) target = $region13
    $region12: #{tpu_custom_call.1} parent=1 // pred_region
      _
    $region13: #{tpu_custom_call.1} parent=1 // pred_fallthru
      _
    // Predicated region
    $region14: #{tpu_custom_call.1} parent=1 // pred_check
      _
    $region15: #{tpu_custom_call.1} parent=1 // pred_check_branch
      %29 = sbr.rel (0) target = $region17
    $region16: #{tpu_custom_call.1} parent=1 // pred_region
      _
    $region17: #{tpu_custom_call.1} parent=1 // pred_fallthru
      _
    // Predicated region
    $region18: #{tpu_custom_call.1} parent=1 // pred_check
      _
    $region19: #{tpu_custom_call.1} parent=1 // pred_check_branch
      %31 = sbr.rel (0) target = $region21
    $region20: #{tpu_custom_call.1} parent=1 // pred_region
      _
    $region21: #{tpu_custom_call.1} parent=1 // pred_fallthru
      _
    // Predicated region
    $region22: #{tpu_custom_call.1} parent=1 // pred_check
      _
    $region23: #{tpu_custom_call.1} parent=1 // pred_check_branch
      %33 = sbr.rel (0) target = $region25
    $region24: #{tpu_custom_call.1} parent=1 // pred_region
      _
    $region25: #{tpu_custom_call.1} parent=1 // pred_fallthru
      _
    // Predicated region
    $region26: #{tpu_custom_call.1} parent=1 // pred_check
      _
    $region27: #{tpu_custom_call.1} parent=1 // pred_check_branch
      %35 = sbr.rel (0) target = $region29
    $region28: #{tpu_custom_call.1} parent=1 // pred_region
      _
    $region29: #{tpu_custom_call.1} parent=1 // pred_fallthru
      _
    // Predicated region
    $region30: #{tpu_custom_call.1} parent=1 // pred_check
      _
    $region31: #{tpu_custom_call.1} parent=1 // pred_check_branch
      %37 = sbr.rel (0) target = $region33
    $region32: #{tpu_custom_call.1} parent=1 // pred_region
      %s39 = ssub.s32 16, 16
      %40 = vsyncadd [#allocation3], %s39
      %s42 = sshll.u32 [#allocation2], 4
      %s43 = int_to_ptr.vmem [resolvable:$true] %s42
      %45 = dma.hbm_to_vmem [thread:$0]  %s7, 16, %s43, [#allocation3]
    $region33: #{tpu_custom_call.1} parent=1 // pred_fallthru
      _
    // Predicated region
    $region34: #{tpu_custom_call.1} parent=1 // pred_check
      _
    $region35: #{tpu_custom_call.1} parent=1 // pred_check_branch
      %47 = sbr.rel (0) target = $region37
    $region36: #{tpu_custom_call.1} parent=1 // pred_region
      %s49 = ssub.s32 16, 16
      %50 = vsyncadd [#allocation6], %s49
      %s52 = sshll.u32 [#allocation5], 4
      %s53 = int_to_ptr.vmem [resolvable:$true] %s52
      %55 = dma.hbm_to_vmem [thread:$0]  %s8, 16, %s53, [#allocation6]
    $region37: #{tpu_custom_call.1} parent=1 // pred_fallthru
      _
    // Predicated region
    $region38: #{tpu_custom_call.1} parent=1 // pred_check
      _
    $region39: #{tpu_custom_call.1} parent=1 // pred_check_branch
      %57 = sbr.rel (0) target = $region41
    $region40: #{tpu_custom_call.1} parent=1 // pred_region
      %s59 = ssub.s32 256, 256
      %60 = vsyncadd [#allocation6], %s59
      %s61 = sshll.u32 [#allocation7], 4
      %s62 = int_to_ptr.vmem [resolvable:$true] %s61
      %67 = dma.hbm_to_vmem [thread:$0]  %s9, 256, %s62, [#allocation6], 64, 64, 4
    $region41: #{tpu_custom_call.1} parent=1 // pred_fallthru
      _
    // Predicated region
    $region42: #{tpu_custom_call.1} parent=1 // pred_check
      _
    $region43: #{tpu_custom_call.1} parent=1 // pred_check_branch
      %69 = sbr.rel (0) target = $region45
    $region44: #{tpu_custom_call.1} parent=1 // pred_region
      %s71 = ssub.s32 16, 16
      %72 = vsyncadd [#allocation9], %s71
      %s74 = sshll.u32 [#allocation8], 4
      %s75 = int_to_ptr.vmem [resolvable:$true] %s74
      %77 = dma.hbm_to_vmem [thread:$0]  %s10, 16, %s75, [#allocation9]
    $region45: #{tpu_custom_call.1} parent=1 // pred_fallthru
      _
    // Predicated region
    $region46: #{tpu_custom_call.1} parent=1 // pred_check
      _
    $region47: #{tpu_custom_call.1} parent=1 // pred_check_branch
      %79 = sbr.rel (0) target = $region49
    $region48: #{tpu_custom_call.1} parent=1 // pred_region
      _
    $region49: #{tpu_custom_call.1} parent=1 // pred_fallthru
      _
    // Predicated region
    $region50: #{tpu_custom_call.1} parent=1 // pred_check
      _
    $region51: #{tpu_custom_call.1} parent=1 // pred_check_branch
      %81 = sbr.rel (0) target = $region53
    $region52: #{tpu_custom_call.1} parent=1 // pred_region
      _
    $region53: #{tpu_custom_call.1} parent=1 // pred_fallthru
      _
    // Predicated region
    $region54: #{tpu_custom_call.1} parent=1 // pred_check
      _
    $region55: #{tpu_custom_call.1} parent=1 // pred_check_branch
      %83 = sbr.rel (0) target = $region57
    $region56: #{tpu_custom_call.1} parent=1 // pred_region
      %84 = dma.done [#allocation3], 16
    $region57: #{tpu_custom_call.1} parent=1 // pred_fallthru
      _
    // Predicated region
    $region58: #{tpu_custom_call.1} parent=1 // pred_check
      _
    $region59: #{tpu_custom_call.1} parent=1 // pred_check_branch
      %86 = sbr.rel (0) target = $region61
    $region60: #{tpu_custom_call.1} parent=1 // pred_region
      %87 = dma.done [#allocation6], 16
    $region61: #{tpu_custom_call.1} parent=1 // pred_fallthru
      _
    // Predicated region
    $region62: #{tpu_custom_call.1} parent=1 // pred_check
      _
    $region63: #{tpu_custom_call.1} parent=1 // pred_check_branch
      %89 = sbr.rel (0) target = $region65
    $region64: #{tpu_custom_call.1} parent=1 // pred_region
      %90 = dma.done [#allocation6], 256
    $region65: #{tpu_custom_call.1} parent=1 // pred_fallthru
      _
    // Predicated region
    $region66: #{tpu_custom_call.1} parent=1 // pred_check
      _
    $region67: #{tpu_custom_call.1} parent=1 // pred_check_branch
      %92 = sbr.rel (0) target = $region69
    $region68: #{tpu_custom_call.1} parent=1 // pred_region
      %93 = dma.done [#allocation9], 16
    $region69: #{tpu_custom_call.1} parent=1 // pred_fallthru
      _
    %v95 = vld [vmem:[%s0] sm:$0xff]
    %v96 = vld [vmem:[%s0 + $0x8] sm:$0xff]
    %v97 = vld [vmem:[%s1] sm:$0x1]
    %v98 = vld [vmem:[%s2] sm:$0x1]
    %vm99 = vcmask 261120
    %v100 = vsel %vm99, %v95, 0.0
    %101 = vadd.xlane.f32.xlu0 %v100
    %v102 = vpop.xlane.xlu0 %101
    %v103 = vsel %vm99, %v96, 0.0
    %104 = vadd.xlane.f32.xlu0 %v103
    %v105 = vpop.xlane.xlu0 %104
    %v106 = vrcp.pop 32.0
    %v107 = vmul.f32 %v102, %v106
    %v108 = vmul.f32 %v105, %v106
    %v109 = vsub.f32 %v95, %v107
    %v110 = vsub.f32 %v96, %v108
    %v111 = vmul.f32 %v109, %v109
    %v112 = vmul.f32 %v110, %v110
    %v113 = vsel %vm99, %v111, 0.0
    %114 = vadd.xlane.f32.xlu0 %v113
    %v115 = vpop.xlane.xlu0 %114
    %v116 = vsel %vm99, %v112, 0.0
    %117 = vadd.xlane.f32.xlu0 %v116
    %v118 = vpop.xlane.xlu0 %117
    %v119 = vmul.f32 %v115, %v106
    %v120 = vmul.f32 %v118, %v106
    %v121 = vadd.f32 %v119, 1e-05
    %v122 = vadd.f32 %v120, 1e-05
    %v123 = vrsqrt.pop %v121
    %v124 = vrsqrt.pop %v122
    %v125 = vmul.f32 %v109, %v123
    %v126 = vmul.f32 %v110, %v124
    %v128 = vlaneseq
    %v129 = vshrl.u32 %v128, 7
    %v130 = vsub.s32 0, %v129
    %v131 = vrot.slane %v97, %v130
    %v133 = vmul.f32 %v125, %v131
    %v134 = vmul.f32 %v126, %v131
    %v136 = vlaneseq
    %v137 = vshrl.u32 %v136, 7
    %v138 = vsub.s32 0, %v137
    %v139 = vrot.slane %v98, %v138
    %v141 = vadd.f32 %v133, %v139
    %v142 = vadd.f32 %v134, %v139
    %v143 = vpack.c.bf16 %v142, %v141
    %v144 = vld [vmem:[%s3] sm:$0xf]
    %v145 = vld [vmem:[%s3 + $0x4] sm:$0xf]
    %v146 = vld [vmem:[%s3 + $0x8] sm:$0xf]
    %v147 = vld [vmem:[%s3 + $0xc] sm:$0xf]
    %v148 = vld [vmem:[%s4] sm:$0x1]
    %v150 = vlaneseq
    %v151 = vshrl.u32 %v150, 7
    %v152 = vsub.s32 0, %v151
    %v153 = vrot.slane %v148, %v152
    %v159 = vunpack.c.l.b16 %v144
    %v160 = vunpack.c.l.b16 %v145
    %v161 = vunpack.c.l.b16 %v146
    %v162 = vunpack.c.l.b16 %v147
    %v163 = vpack.c.b16 %v160, %v159
    %v164 = vpack.c.b16 %v162, %v161
    %v168 = vsel %vm99, %v143, 0
    %170 = vmatprep.subr.bf16.mxu0 0
    %171 = vmatpush1.bf16.msra.mxu0 0
    %172 = vmatprep.subr.bf16.mxu0 0
    %173 = vmatpush1.bf16.msra.mxu0 0
    %174 = vmatprep.subr.bf16.mxu0 0
    %175 = vmatpush1.bf16.msra.mxu0 0
    %176 = vmatprep.subr.bf16.mxu0 0
    %177 = vmatpush1.bf16.msra.mxu0 0
    %178 = vmatprep.subr.bf16.mxu0 0
    %179 = vmatpush1.bf16.msra.mxu0 0
    %180 = vmatprep.subr.bf16.mxu0 0
    %181 = vmatpush1.bf16.msra.mxu0 0
    %182 = vmatprep.subr.bf16.mxu0 0
    %183 = vmatpush1.bf16.msra.mxu0 %v164
    %184 = vmatprep.subr.bf16.mxu0 0
    %185 = vmatpush1.bf16.msra.mxu0 %v163
    %186 = vmatprep.subr.bf16.mxu0 0
    %187 = vmatpush2.bf16.msra.mxu0 0
    %188 = vmatprep.subr.bf16.mxu0 0
    %189 = vmatpush2.bf16.msra.mxu0 0
    %190 = vmatprep.subr.bf16.mxu0 0
    %191 = vmatpush2.bf16.msra.mxu0 0
    %192 = vmatprep.subr.bf16.mxu0 0
    %193 = vmatpush2.bf16.msra.mxu0 0
    %194 = vmatprep.subr.bf16.mxu0 0
    %195 = vmatpush2.bf16.msra.mxu0 0
    %196 = vmatprep.subr.bf16.mxu0 0
    %197 = vmatpush2.bf16.msra.mxu0 0
    %198 = vmatprep.subr.bf16.mxu0 0
    %199 = vmatpush2.bf16.msra.mxu0 0
    %200 = vmatprep.subr.bf16.mxu0 0
    %201 = vmatpush2.bf16.msra.mxu0 0
    %202 = vmatprep.mubr.bf16.mxu0 0
    %203 = vmatmul.mubr.bf16.gmra.mxu0 %v168
    %v204 = vpop.f32.mrf.mxu0
    %v205 = vadd.f32 %v153, %v204
    %v206 = vpop.f32.mrf.mxu0
    %v207 = vpop.f32.mrf.mxu0
    %v208 = vadd.f32 %v153, %v207
    %v209 = vpop.f32.mrf.mxu0
    %210 = vdwg.mxu0
    %v211 = vmul.f32 %v205, 0.35355338
    %v212 = vmul.f32 %v208, 0.35355338
    %214 = vrot.lane.b32.xlu0 %v211, 120
    %v215 = vpop.permute.xlu0 %214
    %217 = vrot.lane.b32.xlu0 %v211, 112
    %v218 = vpop.permute.xlu0 %217
    %220 = vrot.lane.b32.xlu0 %v211, 104
    %v221 = vpop.permute.xlu0 %220
    %v223 = vpack.c.bf16 %v211, %v211
    %v224 = vpack.c.bf16 %v215, %v215
    %v225 = vpack.c.bf16 %v218, %v218
    %v226 = vpack.c.bf16 %v221, %v221
    %228 = vrot.lane.b32.xlu0 %v205, 120
    %v229 = vpop.permute.xlu0 %228
    %231 = vrot.lane.b32.xlu0 %v205, 112
    %v232 = vpop.permute.xlu0 %231
    %234 = vrot.lane.b32.xlu0 %v205, 104
    %v235 = vpop.permute.xlu0 %234
    %v237 = vpack.c.bf16 %v205, %v205
    %v238 = vpack.c.bf16 %v229, %v229
    %v239 = vpack.c.bf16 %v232, %v232
    %v240 = vpack.c.bf16 %v235, %v235
    %242 = vrot.lane.b32.xlu0 %v237, 96
    %v243 = vpop.permute.xlu0 %242
    %vm244 = vcmask 64512
    %v246 = vsel %vm244, %v223, 0
    %v249 = vsel %vm244, %v243, 0
    %251 = vmatprep.subr.bf16.mxu0 0
    %252 = vmatpush1.bf16.xpose.msra.mxu0 0
    %253 = vmatprep.subr.bf16.mxu0 0
    %254 = vmatpush1.bf16.xpose.msra.mxu0 0
    %255 = vmatprep.subr.bf16.mxu0 0
    %256 = vmatpush1.bf16.xpose.msra.mxu0 0
    %257 = vmatprep.subr.bf16.mxu0 0
    %258 = vmatpush1.bf16.xpose.msra.mxu0 0
    %259 = vmatprep.subr.bf16.mxu0 0
    %260 = vmatpush1.bf16.xpose.msra.mxu0 0
    %261 = vmatprep.subr.bf16.mxu0 0
    %262 = vmatpush1.bf16.xpose.msra.mxu0 0
    %263 = vmatprep.subr.bf16.mxu0 0
    %264 = vmatpush1.bf16.xpose.msra.mxu0 0
    %265 = vmatprep.subr.bf16.mxu0 0
    %266 = vmatpush1.bf16.xpose.msra.mxu0 %v249
    %267 = vmatprep.subr.bf16.mxu0 0
    %268 = vmatpush2.bf16.xpose.msra.mxu0 0
    %269 = vmatprep.subr.bf16.mxu0 0
    %270 = vmatpush2.bf16.xpose.msra.mxu0 0
    %271 = vmatprep.subr.bf16.mxu0 0
    %272 = vmatpush2.bf16.xpose.msra.mxu0 0
    %273 = vmatprep.subr.bf16.mxu0 0
    %274 = vmatpush2.bf16.xpose.msra.mxu0 0
    %275 = vmatprep.subr.bf16.mxu0 0
    %276 = vmatpush2.bf16.xpose.msra.mxu0 0
    %277 = vmatprep.subr.bf16.mxu0 0
    %278 = vmatpush2.bf16.xpose.msra.mxu0 0
    %279 = vmatprep.subr.bf16.mxu0 0
    %280 = vmatpush2.bf16.xpose.msra.mxu0 0
    %281 = vmatprep.subr.bf16.mxu0 0
    %282 = vmatpush2.bf16.xpose.msra.mxu0 0
    %283 = vmatprep.mubr.bf16.mxu0 0
    %284 = vmatmul.mubr.bf16.gmra.mxu0 %v246
    %v285 = vpop.f32.mrf.mxu0
    %v286 = vadd.f32 0.0, %v285
    %v287 = vpop.f32.mrf.mxu0
    %v288 = vpop.f32.mrf.mxu0
    %v289 = vpop.f32.mrf.mxu0
    %290 = vdwg.mxu0
    %292 = vrot.lane.b32.xlu0 %v238, 96
    %v293 = vpop.permute.xlu0 %292
    %v295 = vsel %vm244, %v224, 0
    %v298 = vsel %vm244, %v293, 0
    %300 = vmatprep.subr.bf16.mxu0 0
    %301 = vmatpush1.bf16.xpose.msra.mxu0 0
    %302 = vmatprep.subr.bf16.mxu0 0
    %303 = vmatpush1.bf16.xpose.msra.mxu0 0
    %304 = vmatprep.subr.bf16.mxu0 0
    %305 = vmatpush1.bf16.xpose.msra.mxu0 0
    %306 = vmatprep.subr.bf16.mxu0 0
    %307 = vmatpush1.bf16.xpose.msra.mxu0 0
    %308 = vmatprep.subr.bf16.mxu0 0
    %309 = vmatpush1.bf16.xpose.msra.mxu0 0
    %310 = vmatprep.subr.bf16.mxu0 0
    %311 = vmatpush1.bf16.xpose.msra.mxu0 0
    %312 = vmatprep.subr.bf16.mxu0 0
    %313 = vmatpush1.bf16.xpose.msra.mxu0 0
    %314 = vmatprep.subr.bf16.mxu0 0
    %315 = vmatpush1.bf16.xpose.msra.mxu0 %v298
    %316 = vmatprep.subr.bf16.mxu0 0
    %317 = vmatpush2.bf16.xpose.msra.mxu0 0
    %318 = vmatprep.subr.bf16.mxu0 0
    %319 = vmatpush2.bf16.xpose.msra.mxu0 0
    %320 = vmatprep.subr.bf16.mxu0 0
    %321 = vmatpush2.bf16.xpose.msra.mxu0 0
    %322 = vmatprep.subr.bf16.mxu0 0
    %323 = vmatpush2.bf16.xpose.msra.mxu0 0
    %324 = vmatprep.subr.bf16.mxu0 0
    %325 = vmatpush2.bf16.xpose.msra.mxu0 0
    %326 = vmatprep.subr.bf16.mxu0 0
    %327 = vmatpush2.bf16.xpose.msra.mxu0 0
    %328 = vmatprep.subr.bf16.mxu0 0
    %329 = vmatpush2.bf16.xpose.msra.mxu0 0
    %330 = vmatprep.subr.bf16.mxu0 0
    %331 = vmatpush2.bf16.xpose.msra.mxu0 0
    %332 = vmatprep.mubr.bf16.mxu0 0
    %333 = vmatmul.mubr.bf16.gmra.mxu0 %v295
    %v334 = vpop.f32.mrf.mxu0
    %v335 = vadd.f32 0.0, %v334
    %v336 = vpop.f32.mrf.mxu0
    %v337 = vpop.f32.mrf.mxu0
    %v338 = vpop.f32.mrf.mxu0
    %339 = vdwg.mxu0
    %341 = vrot.lane.b32.xlu0 %v239, 96
    %v342 = vpop.permute.xlu0 %341
    %v344 = vsel %vm244, %v225, 0
    %v347 = vsel %vm244, %v342, 0
    %349 = vmatprep.subr.bf16.mxu0 0
    %350 = vmatpush1.bf16.xpose.msra.mxu0 0
    %351 = vmatprep.subr.bf16.mxu0 0
    %352 = vmatpush1.bf16.xpose.msra.mxu0 0
    %353 = vmatprep.subr.bf16.mxu0 0
    %354 = vmatpush1.bf16.xpose.msra.mxu0 0
    %355 = vmatprep.subr.bf16.mxu0 0
    %356 = vmatpush1.bf16.xpose.msra.mxu0 0
    %357 = vmatprep.subr.bf16.mxu0 0
    %358 = vmatpush1.bf16.xpose.msra.mxu0 0
    %359 = vmatprep.subr.bf16.mxu0 0
    %360 = vmatpush1.bf16.xpose.msra.mxu0 0
    %361 = vmatprep.subr.bf16.mxu0 0
    %362 = vmatpush1.bf16.xpose.msra.mxu0 0
    %363 = vmatprep.subr.bf16.mxu0 0
    %364 = vmatpush1.bf16.xpose.msra.mxu0 %v347
    %365 = vmatprep.subr.bf16.mxu0 0
    %366 = vmatpush2.bf16.xpose.msra.mxu0 0
    %367 = vmatprep.subr.bf16.mxu0 0
    %368 = vmatpush2.bf16.xpose.msra.mxu0 0
    %369 = vmatprep.subr.bf16.mxu0 0
    %370 = vmatpush2.bf16.xpose.msra.mxu0 0
    %371 = vmatprep.subr.bf16.mxu0 0
    %372 = vmatpush2.bf16.xpose.msra.mxu0 0
    %373 = vmatprep.subr.bf16.mxu0 0
    %374 = vmatpush2.bf16.xpose.msra.mxu0 0
    %375 = vmatprep.subr.bf16.mxu0 0
    %376 = vmatpush2.bf16.xpose.msra.mxu0 0
    %377 = vmatprep.subr.bf16.mxu0 0
    %378 = vmatpush2.bf16.xpose.msra.mxu0 0
    %379 = vmatprep.subr.bf16.mxu0 0
    %380 = vmatpush2.bf16.xpose.msra.mxu0 0
    %381 = vmatprep.mubr.bf16.mxu0 0
    %382 = vmatmul.mubr.bf16.gmra.mxu0 %v344
    %v383 = vpop.f32.mrf.mxu0
    %v384 = vadd.f32 0.0, %v383
    %v385 = vpop.f32.mrf.mxu0
    %v386 = vpop.f32.mrf.mxu0
    %v387 = vpop.f32.mrf.mxu0
    %388 = vdwg.mxu0
    %390 = vrot.lane.b32.xlu0 %v240, 96
    %v391 = vpop.permute.xlu0 %390
    %v393 = vsel %vm244, %v226, 0
    %v396 = vsel %vm244, %v391, 0
    %398 = vmatprep.subr.bf16.mxu0 0
    %399 = vmatpush1.bf16.xpose.msra.mxu0 0
    %400 = vmatprep.subr.bf16.mxu0 0
    %401 = vmatpush1.bf16.xpose.msra.mxu0 0
    %402 = vmatprep.subr.bf16.mxu0 0
    %403 = vmatpush1.bf16.xpose.msra.mxu0 0
    %404 = vmatprep.subr.bf16.mxu0 0
    %405 = vmatpush1.bf16.xpose.msra.mxu0 0
    %406 = vmatprep.subr.bf16.mxu0 0
    %407 = vmatpush1.bf16.xpose.msra.mxu0 0
    %408 = vmatprep.subr.bf16.mxu0 0
    %409 = vmatpush1.bf16.xpose.msra.mxu0 0
    %410 = vmatprep.subr.bf16.mxu0 0
    %411 = vmatpush1.bf16.xpose.msra.mxu0 0
    %412 = vmatprep.subr.bf16.mxu0 0
    %413 = vmatpush1.bf16.xpose.msra.mxu0 %v396
    %414 = vmatprep.subr.bf16.mxu0 0
    %415 = vmatpush2.bf16.xpose.msra.mxu0 0
    %416 = vmatprep.subr.bf16.mxu0 0
    %417 = vmatpush2.bf16.xpose.msra.mxu0 0
    %418 = vmatprep.subr.bf16.mxu0 0
    %419 = vmatpush2.bf16.xpose.msra.mxu0 0
    %420 = vmatprep.subr.bf16.mxu0 0
    %421 = vmatpush2.bf16.xpose.msra.mxu0 0
    %422 = vmatprep.subr.bf16.mxu0 0
    %423 = vmatpush2.bf16.xpose.msra.mxu0 0
    %424 = vmatprep.subr.bf16.mxu0 0
    %425 = vmatpush2.bf16.xpose.msra.mxu0 0
    %426 = vmatprep.subr.bf16.mxu0 0
    %427 = vmatpush2.bf16.xpose.msra.mxu0 0
    %428 = vmatprep.subr.bf16.mxu0 0
    %429 = vmatpush2.bf16.xpose.msra.mxu0 0
    %430 = vmatprep.mubr.bf16.mxu0 0
    %431 = vmatmul.mubr.bf16.gmra.mxu0 %v393
    %v432 = vpop.f32.mrf.mxu0
    %v433 = vadd.f32 0.0, %v432
    %v434 = vpop.f32.mrf.mxu0
    %v435 = vpop.f32.mrf.mxu0
    %v436 = vpop.f32.mrf.mxu0
    %437 = vdwg.mxu0
    %v438 = vsel %vm244, %v286, -inf
    %439 = vmax.xlane.f32.xlu0 %v438
    %v440 = vpop.xlane.xlu0 %439
    %v441 = vsel %vm244, %v335, -inf
    %442 = vmax.xlane.f32.xlu0 %v441
    %v443 = vpop.xlane.xlu0 %442
    %v444 = vsel %vm244, %v384, -inf
    %445 = vmax.xlane.f32.xlu0 %v444
    %v446 = vpop.xlane.xlu0 %445
    %v447 = vsel %vm244, %v433, -inf
    %448 = vmax.xlane.f32.xlu0 %v447
    %v449 = vpop.xlane.xlu0 %448
    %v450 = vsub.f32 %v286, %v440
    %v451 = vsub.f32 %v335, %v443
    %v452 = vsub.f32 %v384, %v446
    %v453 = vsub.f32 %v433, %v449
    %v454 = vmul.f32 %v450, 1.442695
    %v455 = vpow.pop %v454
    %v456 = vmul.f32 %v451, 1.442695
    %v457 = vpow.pop %v456
    %v458 = vmul.f32 %v452, 1.442695
    %v459 = vpow.pop %v458
    %v460 = vmul.f32 %v453, 1.442695
    %v461 = vpow.pop %v460
    %v462 = vsel %vm244, %v455, 0.0
    %463 = vadd.xlane.f32.xlu0 %v462
    %v464 = vpop.xlane.xlu0 %463
    %v465 = vsel %vm244, %v457, 0.0
    %466 = vadd.xlane.f32.xlu0 %v465
    %v467 = vpop.xlane.xlu0 %466
    %v468 = vsel %vm244, %v459, 0.0
    %469 = vadd.xlane.f32.xlu0 %v468
    %v470 = vpop.xlane.xlu0 %469
    %v471 = vsel %vm244, %v461, 0.0
    %472 = vadd.xlane.f32.xlu0 %v471
    %v473 = vpop.xlane.xlu0 %472
    %v474 = vpack.c.bf16 %v455, %v455
    %v475 = vpack.c.bf16 %v457, %v457
    %v476 = vpack.c.bf16 %v459, %v459
    %v477 = vpack.c.bf16 %v461, %v461
    %478 = vrot.lane.b32.xlu0 %v237, 64
    %v479 = vpop.permute.xlu0 %478
    %v481 = vsel %vm244, %v474, 0
    %vm483 = vcmask 1043456
    %v485 = vsel %vm483, %v479, 0
    %487 = vmatprep.subr.bf16.mxu0 0
    %488 = vmatpush1.bf16.msra.mxu0 0
    %489 = vmatprep.subr.bf16.mxu0 0
    %490 = vmatpush1.bf16.msra.mxu0 0
    %491 = vmatprep.subr.bf16.mxu0 0
    %492 = vmatpush1.bf16.msra.mxu0 0
    %493 = vmatprep.subr.bf16.mxu0 0
    %494 = vmatpush1.bf16.msra.mxu0 0
    %495 = vmatprep.subr.bf16.mxu0 0
    %496 = vmatpush1.bf16.msra.mxu0 0
    %497 = vmatprep.subr.bf16.mxu0 0
    %498 = vmatpush1.bf16.msra.mxu0 0
    %499 = vmatprep.subr.bf16.mxu0 0
    %500 = vmatpush1.bf16.msra.mxu0 0
    %501 = vmatprep.subr.bf16.mxu0 0
    %502 = vmatpush1.bf16.msra.mxu0 %v485
    %503 = vmatprep.subr.bf16.mxu0 0
    %504 = vmatpush2.bf16.msra.mxu0 0
    %505 = vmatprep.subr.bf16.mxu0 0
    %506 = vmatpush2.bf16.msra.mxu0 0
    %507 = vmatprep.subr.bf16.mxu0 0
    %508 = vmatpush2.bf16.msra.mxu0 0
    %509 = vmatprep.subr.bf16.mxu0 0
    %510 = vmatpush2.bf16.msra.mxu0 0
    %511 = vmatprep.subr.bf16.mxu0 0
    %512 = vmatpush2.bf16.msra.mxu0 0
    %513 = vmatprep.subr.bf16.mxu0 0
    %514 = vmatpush2.bf16.msra.mxu0 0
    %515 = vmatprep.subr.bf16.mxu0 0
    %516 = vmatpush2.bf16.msra.mxu0 0
    %517 = vmatprep.subr.bf16.mxu0 0
    %518 = vmatpush2.bf16.msra.mxu0 0
    %519 = vmatprep.mubr.bf16.mxu0 0
    %520 = vmatmul.mubr.bf16.gmra.mxu0 %v481
    %v521 = vpop.f32.mrf.mxu0
    %v522 = vadd.f32 0.0, %v521
    %v523 = vpop.f32.mrf.mxu0
    %v524 = vpop.f32.mrf.mxu0
    %v525 = vpop.f32.mrf.mxu0
    %526 = vdwg.mxu0
    %527 = vrot.lane.b32.xlu0 %v238, 64
    %v528 = vpop.permute.xlu0 %527
    %v530 = vsel %vm244, %v475, 0
    %v533 = vsel %vm483, %v528, 0
    %535 = vmatprep.subr.bf16.mxu0 0
    %536 = vmatpush1.bf16.msra.mxu0 0
    %537 = vmatprep.subr.bf16.mxu0 0
    %538 = vmatpush1.bf16.msra.mxu0 0
    %539 = vmatprep.subr.bf16.mxu0 0
    %540 = vmatpush1.bf16.msra.mxu0 0
    %541 = vmatprep.subr.bf16.mxu0 0
    %542 = vmatpush1.bf16.msra.mxu0 0
    %543 = vmatprep.subr.bf16.mxu0 0
    %544 = vmatpush1.bf16.msra.mxu0 0
    %545 = vmatprep.subr.bf16.mxu0 0
    %546 = vmatpush1.bf16.msra.mxu0 0
    %547 = vmatprep.subr.bf16.mxu0 0
    %548 = vmatpush1.bf16.msra.mxu0 0
    %549 = vmatprep.subr.bf16.mxu0 0
    %550 = vmatpush1.bf16.msra.mxu0 %v533
    %551 = vmatprep.subr.bf16.mxu0 0
    %552 = vmatpush2.bf16.msra.mxu0 0
    %553 = vmatprep.subr.bf16.mxu0 0
    %554 = vmatpush2.bf16.msra.mxu0 0
    %555 = vmatprep.subr.bf16.mxu0 0
    %556 = vmatpush2.bf16.msra.mxu0 0
    %557 = vmatprep.subr.bf16.mxu0 0
    %558 = vmatpush2.bf16.msra.mxu0 0
    %559 = vmatprep.subr.bf16.mxu0 0
    %560 = vmatpush2.bf16.msra.mxu0 0
    %561 = vmatprep.subr.bf16.mxu0 0
    %562 = vmatpush2.bf16.msra.mxu0 0
    %563 = vmatprep.subr.bf16.mxu0 0
    %564 = vmatpush2.bf16.msra.mxu0 0
    %565 = vmatprep.subr.bf16.mxu0 0
    %566 = vmatpush2.bf16.msra.mxu0 0
    %567 = vmatprep.mubr.bf16.mxu0 0
    %568 = vmatmul.mubr.bf16.gmra.mxu0 %v530
    %v569 = vpop.f32.mrf.mxu0
    %v570 = vadd.f32 0.0, %v569
    %v571 = vpop.f32.mrf.mxu0
    %v572 = vpop.f32.mrf.mxu0
    %v573 = vpop.f32.mrf.mxu0
    %574 = vdwg.mxu0
    %575 = vrot.lane.b32.xlu0 %v239, 64
    %v576 = vpop.permute.xlu0 %575
    %v578 = vsel %vm244, %v476, 0
    %v581 = vsel %vm483, %v576, 0
    %583 = vmatprep.subr.bf16.mxu0 0
    %584 = vmatpush1.bf16.msra.mxu0 0
    %585 = vmatprep.subr.bf16.mxu0 0
    %586 = vmatpush1.bf16.msra.mxu0 0
    %587 = vmatprep.subr.bf16.mxu0 0
    %588 = vmatpush1.bf16.msra.mxu0 0
    %589 = vmatprep.subr.bf16.mxu0 0
    %590 = vmatpush1.bf16.msra.mxu0 0
    %591 = vmatprep.subr.bf16.mxu0 0
    %592 = vmatpush1.bf16.msra.mxu0 0
    %593 = vmatprep.subr.bf16.mxu0 0
    %594 = vmatpush1.bf16.msra.mxu0 0
    %595 = vmatprep.subr.bf16.mxu0 0
    %596 = vmatpush1.bf16.msra.mxu0 0
    %597 = vmatprep.subr.bf16.mxu0 0
    %598 = vmatpush1.bf16.msra.mxu0 %v581
    %599 = vmatprep.subr.bf16.mxu0 0
    %600 = vmatpush2.bf16.msra.mxu0 0
    %601 = vmatprep.subr.bf16.mxu0 0
    %602 = vmatpush2.bf16.msra.mxu0 0
    %603 = vmatprep.subr.bf16.mxu0 0
    %604 = vmatpush2.bf16.msra.mxu0 0
    %605 = vmatprep.subr.bf16.mxu0 0
    %606 = vmatpush2.bf16.msra.mxu0 0
    %607 = vmatprep.subr.bf16.mxu0 0
    %608 = vmatpush2.bf16.msra.mxu0 0
    %609 = vmatprep.subr.bf16.mxu0 0
    %610 = vmatpush2.bf16.msra.mxu0 0
    %611 = vmatprep.subr.bf16.mxu0 0
    %612 = vmatpush2.bf16.msra.mxu0 0
    %613 = vmatprep.subr.bf16.mxu0 0
    %614 = vmatpush2.bf16.msra.mxu0 0
    %615 = vmatprep.mubr.bf16.mxu0 0
    %616 = vmatmul.mubr.bf16.gmra.mxu0 %v578
    %v617 = vpop.f32.mrf.mxu0
    %v618 = vadd.f32 0.0, %v617
    %v619 = vpop.f32.mrf.mxu0
    %v620 = vpop.f32.mrf.mxu0
    %v621 = vpop.f32.mrf.mxu0
    %622 = vdwg.mxu0
    %623 = vrot.lane.b32.xlu0 %v240, 64
    %v624 = vpop.permute.xlu0 %623
    %v626 = vsel %vm244, %v477, 0
    %v629 = vsel %vm483, %v624, 0
    %631 = vmatprep.subr.bf16.mxu0 0
    %632 = vmatpush1.bf16.msra.mxu0 0
    %633 = vmatprep.subr.bf16.mxu0 0
    %634 = vmatpush1.bf16.msra.mxu0 0
    %635 = vmatprep.subr.bf16.mxu0 0
    %636 = vmatpush1.bf16.msra.mxu0 0
    %637 = vmatprep.subr.bf16.mxu0 0
    %638 = vmatpush1.bf16.msra.mxu0 0
    %639 = vmatprep.subr.bf16.mxu0 0
    %640 = vmatpush1.bf16.msra.mxu0 0
    %641 = vmatprep.subr.bf16.mxu0 0
    %642 = vmatpush1.bf16.msra.mxu0 0
    %643 = vmatprep.subr.bf16.mxu0 0
    %644 = vmatpush1.bf16.msra.mxu0 0
    %645 = vmatprep.subr.bf16.mxu0 0
    %646 = vmatpush1.bf16.msra.mxu0 %v629
    %647 = vmatprep.subr.bf16.mxu0 0
    %648 = vmatpush2.bf16.msra.mxu0 0
    %649 = vmatprep.subr.bf16.mxu0 0
    %650 = vmatpush2.bf16.msra.mxu0 0
    %651 = vmatprep.subr.bf16.mxu0 0
    %652 = vmatpush2.bf16.msra.mxu0 0
    %653 = vmatprep.subr.bf16.mxu0 0
    %654 = vmatpush2.bf16.msra.mxu0 0
    %655 = vmatprep.subr.bf16.mxu0 0
    %656 = vmatpush2.bf16.msra.mxu0 0
    %657 = vmatprep.subr.bf16.mxu0 0
    %658 = vmatpush2.bf16.msra.mxu0 0
    %659 = vmatprep.subr.bf16.mxu0 0
    %660 = vmatpush2.bf16.msra.mxu0 0
    %661 = vmatprep.subr.bf16.mxu0 0
    %662 = vmatpush2.bf16.msra.mxu0 0
    %663 = vmatprep.mubr.bf16.mxu0 0
    %664 = vmatmul.mubr.bf16.gmra.mxu0 %v626
    %v665 = vpop.f32.mrf.mxu0
    %v666 = vadd.f32 0.0, %v665
    %v667 = vpop.f32.mrf.mxu0
    %v668 = vpop.f32.mrf.mxu0
    %v669 = vpop.f32.mrf.mxu0
    %670 = vdwg.mxu0
    %v671 = vrcp.pop %v464
    %v672 = vmul.f32 1.0, %v671
    %v673 = vrcp.pop %v467
    %v674 = vmul.f32 1.0, %v673
    %v675 = vrcp.pop %v470
    %v676 = vmul.f32 1.0, %v675
    %v677 = vrcp.pop %v473
    %v678 = vmul.f32 1.0, %v677
    %v679 = vmul.f32 %v522, %v672
    %v680 = vmul.f32 %v570, %v674
    %v681 = vmul.f32 %v618, %v676
    %v682 = vmul.f32 %v666, %v678
    %684 = vrot.lane.b32.xlu0 %v680, 8
    %v685 = vpop.permute.xlu0 %684
    %688 = vrot.lane.b32.xlu0 %v681, 16
    %v689 = vpop.permute.xlu0 %688
    %692 = vrot.lane.b32.xlu0 %v682, 24
    %v693 = vpop.permute.xlu0 %692
    %v695 = vsel %vm244, %v679, %v685
    %vm696 = vcmask 130048
    %v697 = vsel %vm696, %v695, %v689
    %vm698 = vcmask 195584
    %v699 = vsel %vm698, %v697, %v693
    %701 = vrot.lane.b32.xlu0 %v212, 120
    %v702 = vpop.permute.xlu0 %701
    %704 = vrot.lane.b32.xlu0 %v212, 112
    %v705 = vpop.permute.xlu0 %704
    %707 = vrot.lane.b32.xlu0 %v212, 104
    %v708 = vpop.permute.xlu0 %707
    %v710 = vpack.c.bf16 %v212, %v212
    %v711 = vpack.c.bf16 %v702, %v702
    %v712 = vpack.c.bf16 %v705, %v705
    %v713 = vpack.c.bf16 %v708, %v708
    %715 = vrot.lane.b32.xlu0 %v208, 120
    %v716 = vpop.permute.xlu0 %715
    %718 = vrot.lane.b32.xlu0 %v208, 112
    %v719 = vpop.permute.xlu0 %718
    %721 = vrot.lane.b32.xlu0 %v208, 104
    %v722 = vpop.permute.xlu0 %721
    %v724 = vpack.c.bf16 %v208, %v208
    %v725 = vpack.c.bf16 %v716, %v716
    %v726 = vpack.c.bf16 %v719, %v719
    %v727 = vpack.c.bf16 %v722, %v722
    %729 = vrot.lane.b32.xlu0 %v724, 96
    %v730 = vpop.permute.xlu0 %729
    %v732 = vsel %vm244, %v710, 0
    %v735 = vsel %vm244, %v730, 0
    %737 = vmatprep.subr.bf16.mxu0 0
    %738 = vmatpush1.bf16.xpose.msra.mxu0 0
    %739 = vmatprep.subr.bf16.mxu0 0
    %740 = vmatpush1.bf16.xpose.msra.mxu0 0
    %741 = vmatprep.subr.bf16.mxu0 0
    %742 = vmatpush1.bf16.xpose.msra.mxu0 0
    %743 = vmatprep.subr.bf16.mxu0 0
    %744 = vmatpush1.bf16.xpose.msra.mxu0 0
    %745 = vmatprep.subr.bf16.mxu0 0
    %746 = vmatpush1.bf16.xpose.msra.mxu0 0
    %747 = vmatprep.subr.bf16.mxu0 0
    %748 = vmatpush1.bf16.xpose.msra.mxu0 0
    %749 = vmatprep.subr.bf16.mxu0 0
    %750 = vmatpush1.bf16.xpose.msra.mxu0 0
    %751 = vmatprep.subr.bf16.mxu0 0
    %752 = vmatpush1.bf16.xpose.msra.mxu0 %v735
    %753 = vmatprep.subr.bf16.mxu0 0
    %754 = vmatpush2.bf16.xpose.msra.mxu0 0
    %755 = vmatprep.subr.bf16.mxu0 0
    %756 = vmatpush2.bf16.xpose.msra.mxu0 0
    %757 = vmatprep.subr.bf16.mxu0 0
    %758 = vmatpush2.bf16.xpose.msra.mxu0 0
    %759 = vmatprep.subr.bf16.mxu0 0
    %760 = vmatpush2.bf16.xpose.msra.mxu0 0
    %761 = vmatprep.subr.bf16.mxu0 0
    %762 = vmatpush2.bf16.xpose.msra.mxu0 0
    %763 = vmatprep.subr.bf16.mxu0 0
    %764 = vmatpush2.bf16.xpose.msra.mxu0 0
    %765 = vmatprep.subr.bf16.mxu0 0
    %766 = vmatpush2.bf16.xpose.msra.mxu0 0
    %767 = vmatprep.subr.bf16.mxu0 0
    %768 = vmatpush2.bf16.xpose.msra.mxu0 0
    %769 = vmatprep.mubr.bf16.mxu0 0
    %770 = vmatmul.mubr.bf16.gmra.mxu0 %v732
    %v771 = vpop.f32.mrf.mxu0
    %v772 = vadd.f32 0.0, %v771
    %v773 = vpop.f32.mrf.mxu0
    %v774 = vpop.f32.mrf.mxu0
    %v775 = vpop.f32.mrf.mxu0
    %776 = vdwg.mxu0
    %778 = vrot.lane.b32.xlu0 %v725, 96
    %v779 = vpop.permute.xlu0 %778
    %v781 = vsel %vm244, %v711, 0
    %v784 = vsel %vm244, %v779, 0
    %786 = vmatprep.subr.bf16.mxu0 0
    %787 = vmatpush1.bf16.xpose.msra.mxu0 0
    %788 = vmatprep.subr.bf16.mxu0 0
    %789 = vmatpush1.bf16.xpose.msra.mxu0 0
    %790 = vmatprep.subr.bf16.mxu0 0
    %791 = vmatpush1.bf16.xpose.msra.mxu0 0
    %792 = vmatprep.subr.bf16.mxu0 0
    %793 = vmatpush1.bf16.xpose.msra.mxu0 0
    %794 = vmatprep.subr.bf16.mxu0 0
    %795 = vmatpush1.bf16.xpose.msra.mxu0 0
    %796 = vmatprep.subr.bf16.mxu0 0
    %797 = vmatpush1.bf16.xpose.msra.mxu0 0
    %798 = vmatprep.subr.bf16.mxu0 0
    %799 = vmatpush1.bf16.xpose.msra.mxu0 0
    %800 = vmatprep.subr.bf16.mxu0 0
    %801 = vmatpush1.bf16.xpose.msra.mxu0 %v784
    %802 = vmatprep.subr.bf16.mxu0 0
    %803 = vmatpush2.bf16.xpose.msra.mxu0 0
    %804 = vmatprep.subr.bf16.mxu0 0
    %805 = vmatpush2.bf16.xpose.msra.mxu0 0
    %806 = vmatprep.subr.bf16.mxu0 0
    %807 = vmatpush2.bf16.xpose.msra.mxu0 0
    %808 = vmatprep.subr.bf16.mxu0 0
    %809 = vmatpush2.bf16.xpose.msra.mxu0 0
    %810 = vmatprep.subr.bf16.mxu0 0
    %811 = vmatpush2.bf16.xpose.msra.mxu0 0
    %812 = vmatprep.subr.bf16.mxu0 0
    %813 = vmatpush2.bf16.xpose.msra.mxu0 0
    %814 = vmatprep.subr.bf16.mxu0 0
    %815 = vmatpush2.bf16.xpose.msra.mxu0 0
    %816 = vmatprep.subr.bf16.mxu0 0
    %817 = vmatpush2.bf16.xpose.msra.mxu0 0
    %818 = vmatprep.mubr.bf16.mxu0 0
    %819 = vmatmul.mubr.bf16.gmra.mxu0 %v781
    %v820 = vpop.f32.mrf.mxu0
    %v821 = vadd.f32 0.0, %v820
    %v822 = vpop.f32.mrf.mxu0
    %v823 = vpop.f32.mrf.mxu0
    %v824 = vpop.f32.mrf.mxu0
    %825 = vdwg.mxu0
    %827 = vrot.lane.b32.xlu0 %v726, 96
    %v828 = vpop.permute.xlu0 %827
    %v830 = vsel %vm244, %v712, 0
    %v833 = vsel %vm244, %v828, 0
    %835 = vmatprep.subr.bf16.mxu0 0
    %836 = vmatpush1.bf16.xpose.msra.mxu0 0
    %837 = vmatprep.subr.bf16.mxu0 0
    %838 = vmatpush1.bf16.xpose.msra.mxu0 0
    %839 = vmatprep.subr.bf16.mxu0 0
    %840 = vmatpush1.bf16.xpose.msra.mxu0 0
    %841 = vmatprep.subr.bf16.mxu0 0
    %842 = vmatpush1.bf16.xpose.msra.mxu0 0
    %843 = vmatprep.subr.bf16.mxu0 0
    %844 = vmatpush1.bf16.xpose.msra.mxu0 0
    %845 = vmatprep.subr.bf16.mxu0 0
    %846 = vmatpush1.bf16.xpose.msra.mxu0 0
    %847 = vmatprep.subr.bf16.mxu0 0
    %848 = vmatpush1.bf16.xpose.msra.mxu0 0
    %849 = vmatprep.subr.bf16.mxu0 0
    %850 = vmatpush1.bf16.xpose.msra.mxu0 %v833
    %851 = vmatprep.subr.bf16.mxu0 0
    %852 = vmatpush2.bf16.xpose.msra.mxu0 0
    %853 = vmatprep.subr.bf16.mxu0 0
    %854 = vmatpush2.bf16.xpose.msra.mxu0 0
    %855 = vmatprep.subr.bf16.mxu0 0
    %856 = vmatpush2.bf16.xpose.msra.mxu0 0
    %857 = vmatprep.subr.bf16.mxu0 0
    %858 = vmatpush2.bf16.xpose.msra.mxu0 0
    %859 = vmatprep.subr.bf16.mxu0 0
    %860 = vmatpush2.bf16.xpose.msra.mxu0 0
    %861 = vmatprep.subr.bf16.mxu0 0
    %862 = vmatpush2.bf16.xpose.msra.mxu0 0
    %863 = vmatprep.subr.bf16.mxu0 0
    %864 = vmatpush2.bf16.xpose.msra.mxu0 0
    %865 = vmatprep.subr.bf16.mxu0 0
    %866 = vmatpush2.bf16.xpose.msra.mxu0 0
    %867 = vmatprep.mubr.bf16.mxu0 0
    %868 = vmatmul.mubr.bf16.gmra.mxu0 %v830
    %v869 = vpop.f32.mrf.mxu0
    %v870 = vadd.f32 0.0, %v869
    %v871 = vpop.f32.mrf.mxu0
    %v872 = vpop.f32.mrf.mxu0
    %v873 = vpop.f32.mrf.mxu0
    %874 = vdwg.mxu0
    %876 = vrot.lane.b32.xlu0 %v727, 96
    %v877 = vpop.permute.xlu0 %876
    %v879 = vsel %vm244, %v713, 0
    %v882 = vsel %vm244, %v877, 0
    %884 = vmatprep.subr.bf16.mxu0 0
    %885 = vmatpush1.bf16.xpose.msra.mxu0 0
    %886 = vmatprep.subr.bf16.mxu0 0
    %887 = vmatpush1.bf16.xpose.msra.mxu0 0
    %888 = vmatprep.subr.bf16.mxu0 0
    %889 = vmatpush1.bf16.xpose.msra.mxu0 0
    %890 = vmatprep.subr.bf16.mxu0 0
    %891 = vmatpush1.bf16.xpose.msra.mxu0 0
    %892 = vmatprep.subr.bf16.mxu0 0
    %893 = vmatpush1.bf16.xpose.msra.mxu0 0
    %894 = vmatprep.subr.bf16.mxu0 0
    %895 = vmatpush1.bf16.xpose.msra.mxu0 0
    %896 = vmatprep.subr.bf16.mxu0 0
    %897 = vmatpush1.bf16.xpose.msra.mxu0 0
    %898 = vmatprep.subr.bf16.mxu0 0
    %899 = vmatpush1.bf16.xpose.msra.mxu0 %v882
    %900 = vmatprep.subr.bf16.mxu0 0
    %901 = vmatpush2.bf16.xpose.msra.mxu0 0
    %902 = vmatprep.subr.bf16.mxu0 0
    %903 = vmatpush2.bf16.xpose.msra.mxu0 0
    %904 = vmatprep.subr.bf16.mxu0 0
    %905 = vmatpush2.bf16.xpose.msra.mxu0 0
    %906 = vmatprep.subr.bf16.mxu0 0
    %907 = vmatpush2.bf16.xpose.msra.mxu0 0
    %908 = vmatprep.subr.bf16.mxu0 0
    %909 = vmatpush2.bf16.xpose.msra.mxu0 0
    %910 = vmatprep.subr.bf16.mxu0 0
    %911 = vmatpush2.bf16.xpose.msra.mxu0 0
    %912 = vmatprep.subr.bf16.mxu0 0
    %913 = vmatpush2.bf16.xpose.msra.mxu0 0
    %914 = vmatprep.subr.bf16.mxu0 0
    %915 = vmatpush2.bf16.xpose.msra.mxu0 0
    %916 = vmatprep.mubr.bf16.mxu0 0
    %917 = vmatmul.mubr.bf16.gmra.mxu0 %v879
    %v918 = vpop.f32.mrf.mxu0
    %v919 = vadd.f32 0.0, %v918
    %v920 = vpop.f32.mrf.mxu0
    %v921 = vpop.f32.mrf.mxu0
    %v922 = vpop.f32.mrf.mxu0
    %923 = vdwg.mxu0
    %v924 = vsel %vm244, %v772, -inf
    %925 = vmax.xlane.f32.xlu0 %v924
    %v926 = vpop.xlane.xlu0 %925
    %v927 = vsel %vm244, %v821, -inf
    %928 = vmax.xlane.f32.xlu0 %v927
    %v929 = vpop.xlane.xlu0 %928
    %v930 = vsel %vm244, %v870, -inf
    %931 = vmax.xlane.f32.xlu0 %v930
    %v932 = vpop.xlane.xlu0 %931
    %v933 = vsel %vm244, %v919, -inf
    %934 = vmax.xlane.f32.xlu0 %v933
    %v935 = vpop.xlane.xlu0 %934
    %v936 = vsub.f32 %v772, %v926
    %v937 = vsub.f32 %v821, %v929
    %v938 = vsub.f32 %v870, %v932
    %v939 = vsub.f32 %v919, %v935
    %v940 = vmul.f32 %v936, 1.442695
    %v941 = vpow.pop %v940
    %v942 = vmul.f32 %v937, 1.442695
    %v943 = vpow.pop %v942
    %v944 = vmul.f32 %v938, 1.442695
    %v945 = vpow.pop %v944
    %v946 = vmul.f32 %v939, 1.442695
    %v947 = vpow.pop %v946
    %v948 = vsel %vm244, %v941, 0.0
    %949 = vadd.xlane.f32.xlu0 %v948
    %v950 = vpop.xlane.xlu0 %949
    %v951 = vsel %vm244, %v943, 0.0
    %952 = vadd.xlane.f32.xlu0 %v951
    %v953 = vpop.xlane.xlu0 %952
    %v954 = vsel %vm244, %v945, 0.0
    %955 = vadd.xlane.f32.xlu0 %v954
    %v956 = vpop.xlane.xlu0 %955
    %v957 = vsel %vm244, %v947, 0.0
    %958 = vadd.xlane.f32.xlu0 %v957
    %v959 = vpop.xlane.xlu0 %958
    %v960 = vpack.c.bf16 %v941, %v941
    %v961 = vpack.c.bf16 %v943, %v943
    %v962 = vpack.c.bf16 %v945, %v945
    %v963 = vpack.c.bf16 %v947, %v947
    %964 = vrot.lane.b32.xlu0 %v724, 64
    %v965 = vpop.permute.xlu0 %964
    %v967 = vsel %vm244, %v960, 0
    %v970 = vsel %vm483, %v965, 0
    %972 = vmatprep.subr.bf16.mxu0 0
    %973 = vmatpush1.bf16.msra.mxu0 0
    %974 = vmatprep.subr.bf16.mxu0 0
    %975 = vmatpush1.bf16.msra.mxu0 0
    %976 = vmatprep.subr.bf16.mxu0 0
    %977 = vmatpush1.bf16.msra.mxu0 0
    %978 = vmatprep.subr.bf16.mxu0 0
    %979 = vmatpush1.bf16.msra.mxu0 0
    %980 = vmatprep.subr.bf16.mxu0 0
    %981 = vmatpush1.bf16.msra.mxu0 0
    %982 = vmatprep.subr.bf16.mxu0 0
    %983 = vmatpush1.bf16.msra.mxu0 0
    %984 = vmatprep.subr.bf16.mxu0 0
    %985 = vmatpush1.bf16.msra.mxu0 0
    %986 = vmatprep.subr.bf16.mxu0 0
    %987 = vmatpush1.bf16.msra.mxu0 %v970
    %988 = vmatprep.subr.bf16.mxu0 0
    %989 = vmatpush2.bf16.msra.mxu0 0
    %990 = vmatprep.subr.bf16.mxu0 0
    %991 = vmatpush2.bf16.msra.mxu0 0
    %992 = vmatprep.subr.bf16.mxu0 0
    %993 = vmatpush2.bf16.msra.mxu0 0
    %994 = vmatprep.subr.bf16.mxu0 0
    %995 = vmatpush2.bf16.msra.mxu0 0
    %996 = vmatprep.subr.bf16.mxu0 0
    %997 = vmatpush2.bf16.msra.mxu0 0
    %998 = vmatprep.subr.bf16.mxu0 0
    %999 = vmatpush2.bf16.msra.mxu0 0
    %1000 = vmatprep.subr.bf16.mxu0 0
    %1001 = vmatpush2.bf16.msra.mxu0 0
    %1002 = vmatprep.subr.bf16.mxu0 0
    %1003 = vmatpush2.bf16.msra.mxu0 0
    %1004 = vmatprep.mubr.bf16.mxu0 0
    %1005 = vmatmul.mubr.bf16.gmra.mxu0 %v967
    %v1006 = vpop.f32.mrf.mxu0
    %v1007 = vadd.f32 0.0, %v1006
    %v1008 = vpop.f32.mrf.mxu0
    %v1009 = vpop.f32.mrf.mxu0
    %v1010 = vpop.f32.mrf.mxu0
    %1011 = vdwg.mxu0
    %1012 = vrot.lane.b32.xlu0 %v725, 64
    %v1013 = vpop.permute.xlu0 %1012
    %v1015 = vsel %vm244, %v961, 0
    %v1018 = vsel %vm483, %v1013, 0
    %1020 = vmatprep.subr.bf16.mxu0 0
    %1021 = vmatpush1.bf16.msra.mxu0 0
    %1022 = vmatprep.subr.bf16.mxu0 0
    %1023 = vmatpush1.bf16.msra.mxu0 0
    %1024 = vmatprep.subr.bf16.mxu0 0
    %1025 = vmatpush1.bf16.msra.mxu0 0
    %1026 = vmatprep.subr.bf16.mxu0 0
    %1027 = vmatpush1.bf16.msra.mxu0 0
    %1028 = vmatprep.subr.bf16.mxu0 0
    %1029 = vmatpush1.bf16.msra.mxu0 0
    %1030 = vmatprep.subr.bf16.mxu0 0
    %1031 = vmatpush1.bf16.msra.mxu0 0
    %1032 = vmatprep.subr.bf16.mxu0 0
    %1033 = vmatpush1.bf16.msra.mxu0 0
    %1034 = vmatprep.subr.bf16.mxu0 0
    %1035 = vmatpush1.bf16.msra.mxu0 %v1018
    %1036 = vmatprep.subr.bf16.mxu0 0
    %1037 = vmatpush2.bf16.msra.mxu0 0
    %1038 = vmatprep.subr.bf16.mxu0 0
    %1039 = vmatpush2.bf16.msra.mxu0 0
    %1040 = vmatprep.subr.bf16.mxu0 0
    %1041 = vmatpush2.bf16.msra.mxu0 0
    %1042 = vmatprep.subr.bf16.mxu0 0
    %1043 = vmatpush2.bf16.msra.mxu0 0
    %1044 = vmatprep.subr.bf16.mxu0 0
    %1045 = vmatpush2.bf16.msra.mxu0 0
    %1046 = vmatprep.subr.bf16.mxu0 0
    %1047 = vmatpush2.bf16.msra.mxu0 0
    %1048 = vmatprep.subr.bf16.mxu0 0
    %1049 = vmatpush2.bf16.msra.mxu0 0
    %1050 = vmatprep.subr.bf16.mxu0 0
    %1051 = vmatpush2.bf16.msra.mxu0 0
    %1052 = vmatprep.mubr.bf16.mxu0 0
    %1053 = vmatmul.mubr.bf16.gmra.mxu0 %v1015
    %v1054 = vpop.f32.mrf.mxu0
    %v1055 = vadd.f32 0.0, %v1054
    %v1056 = vpop.f32.mrf.mxu0
    %v1057 = vpop.f32.mrf.mxu0
    %v1058 = vpop.f32.mrf.mxu0
    %1059 = vdwg.mxu0
    %1060 = vrot.lane.b32.xlu0 %v726, 64
    %v1061 = vpop.permute.xlu0 %1060
    %v1063 = vsel %vm244, %v962, 0
    %v1066 = vsel %vm483, %v1061, 0
    %1068 = vmatprep.subr.bf16.mxu0 0
    %1069 = vmatpush1.bf16.msra.mxu0 0
    %1070 = vmatprep.subr.bf16.mxu0 0
    %1071 = vmatpush1.bf16.msra.mxu0 0
    %1072 = vmatprep.subr.bf16.mxu0 0
    %1073 = vmatpush1.bf16.msra.mxu0 0
    %1074 = vmatprep.subr.bf16.mxu0 0
    %1075 = vmatpush1.bf16.msra.mxu0 0
    %1076 = vmatprep.subr.bf16.mxu0 0
    %1077 = vmatpush1.bf16.msra.mxu0 0
    %1078 = vmatprep.subr.bf16.mxu0 0
    %1079 = vmatpush1.bf16.msra.mxu0 0
    %1080 = vmatprep.subr.bf16.mxu0 0
    %1081 = vmatpush1.bf16.msra.mxu0 0
    %1082 = vmatprep.subr.bf16.mxu0 0
    %1083 = vmatpush1.bf16.msra.mxu0 %v1066
    %1084 = vmatprep.subr.bf16.mxu0 0
    %1085 = vmatpush2.bf16.msra.mxu0 0
    %1086 = vmatprep.subr.bf16.mxu0 0
    %1087 = vmatpush2.bf16.msra.mxu0 0
    %1088 = vmatprep.subr.bf16.mxu0 0
    %1089 = vmatpush2.bf16.msra.mxu0 0
    %1090 = vmatprep.subr.bf16.mxu0 0
    %1091 = vmatpush2.bf16.msra.mxu0 0
    %1092 = vmatprep.subr.bf16.mxu0 0
    %1093 = vmatpush2.bf16.msra.mxu0 0
    %1094 = vmatprep.subr.bf16.mxu0 0
    %1095 = vmatpush2.bf16.msra.mxu0 0
    %1096 = vmatprep.subr.bf16.mxu0 0
    %1097 = vmatpush2.bf16.msra.mxu0 0
    %1098 = vmatprep.subr.bf16.mxu0 0
    %1099 = vmatpush2.bf16.msra.mxu0 0
    %1100 = vmatprep.mubr.bf16.mxu0 0
    %1101 = vmatmul.mubr.bf16.gmra.mxu0 %v1063
    %v1102 = vpop.f32.mrf.mxu0
    %v1103 = vadd.f32 0.0, %v1102
    %v1104 = vpop.f32.mrf.mxu0
    %v1105 = vpop.f32.mrf.mxu0
    %v1106 = vpop.f32.mrf.mxu0
    %1107 = vdwg.mxu0
    %1108 = vrot.lane.b32.xlu0 %v727, 64
    %v1109 = vpop.permute.xlu0 %1108
    %v1111 = vsel %vm244, %v963, 0
    %v1114 = vsel %vm483, %v1109, 0
    %1116 = vmatprep.subr.bf16.mxu0 0
    %1117 = vmatpush1.bf16.msra.mxu0 0
    %1118 = vmatprep.subr.bf16.mxu0 0
    %1119 = vmatpush1.bf16.msra.mxu0 0
    %1120 = vmatprep.subr.bf16.mxu0 0
    %1121 = vmatpush1.bf16.msra.mxu0 0
    %1122 = vmatprep.subr.bf16.mxu0 0
    %1123 = vmatpush1.bf16.msra.mxu0 0
    %1124 = vmatprep.subr.bf16.mxu0 0
    %1125 = vmatpush1.bf16.msra.mxu0 0
    %1126 = vmatprep.subr.bf16.mxu0 0
    %1127 = vmatpush1.bf16.msra.mxu0 0
    %1128 = vmatprep.subr.bf16.mxu0 0
    %1129 = vmatpush1.bf16.msra.mxu0 0
    %1130 = vmatprep.subr.bf16.mxu0 0
    %1131 = vmatpush1.bf16.msra.mxu0 %v1114
    %1132 = vmatprep.subr.bf16.mxu0 0
    %1133 = vmatpush2.bf16.msra.mxu0 0
    %1134 = vmatprep.subr.bf16.mxu0 0
    %1135 = vmatpush2.bf16.msra.mxu0 0
    %1136 = vmatprep.subr.bf16.mxu0 0
    %1137 = vmatpush2.bf16.msra.mxu0 0
    %1138 = vmatprep.subr.bf16.mxu0 0
    %1139 = vmatpush2.bf16.msra.mxu0 0
    %1140 = vmatprep.subr.bf16.mxu0 0
    %1141 = vmatpush2.bf16.msra.mxu0 0
    %1142 = vmatprep.subr.bf16.mxu0 0
    %1143 = vmatpush2.bf16.msra.mxu0 0
    %1144 = vmatprep.subr.bf16.mxu0 0
    %1145 = vmatpush2.bf16.msra.mxu0 0
    %1146 = vmatprep.subr.bf16.mxu0 0
    %1147 = vmatpush2.bf16.msra.mxu0 0
    %1148 = vmatprep.mubr.bf16.mxu0 0
    %1149 = vmatmul.mubr.bf16.gmra.mxu0 %v1111
    %v1150 = vpop.f32.mrf.mxu0
    %v1151 = vadd.f32 0.0, %v1150
    %v1152 = vpop.f32.mrf.mxu0
    %v1153 = vpop.f32.mrf.mxu0
    %v1154 = vpop.f32.mrf.mxu0
    %1155 = vdwg.mxu0
    %v1156 = vrcp.pop %v950
    %v1157 = vmul.f32 1.0, %v1156
    %v1158 = vrcp.pop %v953
    %v1159 = vmul.f32 1.0, %v1158
    %v1160 = vrcp.pop %v956
    %v1161 = vmul.f32 1.0, %v1160
    %v1162 = vrcp.pop %v959
    %v1163 = vmul.f32 1.0, %v1162
    %v1164 = vmul.f32 %v1007, %v1157
    %v1165 = vmul.f32 %v1055, %v1159
    %v1166 = vmul.f32 %v1103, %v1161
    %v1167 = vmul.f32 %v1151, %v1163
    %1169 = vrot.lane.b32.xlu0 %v1165, 8
    %v1170 = vpop.permute.xlu0 %1169
    %1173 = vrot.lane.b32.xlu0 %v1166, 16
    %v1174 = vpop.permute.xlu0 %1173
    %1177 = vrot.lane.b32.xlu0 %v1167, 24
    %v1178 = vpop.permute.xlu0 %1177
    %v1180 = vsel %vm244, %v1164, %v1170
    %v1181 = vsel %vm696, %v1180, %v1174
    %v1182 = vsel %vm698, %v1181, %v1178
    %v1183 = vpack.c.bf16 %v1182, %v699
    %v1184 = vld [vmem:[%s5] sm:$0xf]
    %v1185 = vld [vmem:[%s5 + $0x4] sm:$0xf]
    %v1186 = vld [vmem:[%s5 + $0x8] sm:$0xf]
    %v1187 = vld [vmem:[%s5 + $0xc] sm:$0xf]
    %v1188 = vld [vmem:[%s6] sm:$0x1]
    %v1190 = vlaneseq
    %v1191 = vshrl.u32 %v1190, 7
    %v1192 = vsub.s32 0, %v1191
    %v1193 = vrot.slane %v1188, %v1192
    %v1199 = vunpack.c.l.b16 %v1184
    %v1200 = vunpack.c.l.b16 %v1185
    %v1201 = vunpack.c.l.b16 %v1186
    %v1202 = vunpack.c.l.b16 %v1187
    %v1203 = vpack.c.b16 %v1200, %v1199
    %v1204 = vpack.c.b16 %v1202, %v1201
    %v1208 = vsel %vm99, %v1183, 0
    %1210 = vmatprep.subr.bf16.mxu0 0
    %1211 = vmatpush1.bf16.msra.mxu0 0
    %1212 = vmatprep.subr.bf16.mxu0 0
    %1213 = vmatpush1.bf16.msra.mxu0 0
    %1214 = vmatprep.subr.bf16.mxu0 0
    %1215 = vmatpush1.bf16.msra.mxu0 0
    %1216 = vmatprep.subr.bf16.mxu0 0
    %1217 = vmatpush1.bf16.msra.mxu0 0
    %1218 = vmatprep.subr.bf16.mxu0 0
    %1219 = vmatpush1.bf16.msra.mxu0 0
    %1220 = vmatprep.subr.bf16.mxu0 0
    %1221 = vmatpush1.bf16.msra.mxu0 0
    %1222 = vmatprep.subr.bf16.mxu0 0
    %1223 = vmatpush1.bf16.msra.mxu0 %v1204
    %1224 = vmatprep.subr.bf16.mxu0 0
    %1225 = vmatpush1.bf16.msra.mxu0 %v1203
    %1226 = vmatprep.subr.bf16.mxu0 0
    %1227 = vmatpush2.bf16.msra.mxu0 0
    %1228 = vmatprep.subr.bf16.mxu0 0
    %1229 = vmatpush2.bf16.msra.mxu0 0
    %1230 = vmatprep.subr.bf16.mxu0 0
    %1231 = vmatpush2.bf16.msra.mxu0 0
    %1232 = vmatprep.subr.bf16.mxu0 0
    %1233 = vmatpush2.bf16.msra.mxu0 0
    %1234 = vmatprep.subr.bf16.mxu0 0
    %1235 = vmatpush2.bf16.msra.mxu0 0
    %1236 = vmatprep.subr.bf16.mxu0 0
    %1237 = vmatpush2.bf16.msra.mxu0 0
    %1238 = vmatprep.subr.bf16.mxu0 0
    %1239 = vmatpush2.bf16.msra.mxu0 0
    %1240 = vmatprep.subr.bf16.mxu0 0
    %1241 = vmatpush2.bf16.msra.mxu0 0
    %1242 = vmatprep.mubr.bf16.mxu0 0
    %1243 = vmatmul.mubr.bf16.gmra.mxu0 %v1208
    %v1244 = vpop.f32.mrf.mxu0
    %v1245 = vadd.f32 %v1193, %v1244
    %v1246 = vpop.f32.mrf.mxu0
    %v1247 = vpop.f32.mrf.mxu0
    %v1248 = vadd.f32 %v1193, %v1247
    %v1249 = vpop.f32.mrf.mxu0
    %1250 = vdwg.mxu0
    %v1251 = vadd.f32 %v95, %v1245
    %v1252 = vadd.f32 %v96, %v1248
    %v1253 = vld [vmem:[#allocation2] sm:$0x1]
    %v1254 = vld [vmem:[#allocation5] sm:$0x1]
    %v1255 = vsel %vm99, %v1251, 0.0
    %1256 = vadd.xlane.f32.xlu0 %v1255
    %v1257 = vpop.xlane.xlu0 %1256
    %v1258 = vsel %vm99, %v1252, 0.0
    %1259 = vadd.xlane.f32.xlu0 %v1258
    %v1260 = vpop.xlane.xlu0 %1259
    %v1261 = vmul.f32 %v1257, %v106
    %v1262 = vmul.f32 %v1260, %v106
    %v1263 = vsub.f32 %v1251, %v1261
    %v1264 = vsub.f32 %v1252, %v1262
    %v1265 = vmul.f32 %v1263, %v1263
    %v1266 = vmul.f32 %v1264, %v1264
    %v1267 = vsel %vm99, %v1265, 0.0
    %1268 = vadd.xlane.f32.xlu0 %v1267
    %v1269 = vpop.xlane.xlu0 %1268
    %v1270 = vsel %vm99, %v1266, 0.0
    %1271 = vadd.xlane.f32.xlu0 %v1270
    %v1272 = vpop.xlane.xlu0 %1271
    %v1273 = vmul.f32 %v1269, %v106
    %v1274 = vmul.f32 %v1272, %v106
    %v1275 = vadd.f32 %v1273, 1e-05
    %v1276 = vadd.f32 %v1274, 1e-05
    %v1277 = vrsqrt.pop %v1275
    %v1278 = vrsqrt.pop %v1276
    %v1279 = vmul.f32 %v1263, %v1277
    %v1280 = vmul.f32 %v1264, %v1278
    %v1282 = vlaneseq
    %v1283 = vshrl.u32 %v1282, 7
    %v1284 = vsub.s32 0, %v1283
    %v1285 = vrot.slane %v1253, %v1284
    %v1287 = vmul.f32 %v1279, %v1285
    %v1288 = vmul.f32 %v1280, %v1285
    %v1290 = vlaneseq
    %v1291 = vshrl.u32 %v1290, 7
    %v1292 = vsub.s32 0, %v1291
    %v1293 = vrot.slane %v1254, %v1292
    %v1295 = vadd.f32 %v1287, %v1293
    %v1296 = vadd.f32 %v1288, %v1293
    %v1297 = vpack.c.bf16 %v1296, %v1295
    %v1298 = vld [vmem:[#allocation7] sm:$0xf]
    %v1299 = vld [vmem:[#allocation7 + $0x4] sm:$0xf]
    %v1300 = vld [vmem:[#allocation7 + $0x8] sm:$0xf]
    %v1301 = vld [vmem:[#allocation7 + $0xc] sm:$0xf]
    %v1302 = vld [vmem:[#allocation8] sm:$0x1]
    %v1304 = vlaneseq
    %v1305 = vshrl.u32 %v1304, 7
    %v1306 = vsub.s32 0, %v1305
    %v1307 = vrot.slane %v1302, %v1306
    %v1313 = vunpack.c.l.b16 %v1298
    %v1314 = vunpack.c.l.b16 %v1299
    %v1315 = vunpack.c.l.b16 %v1300
    %v1316 = vunpack.c.l.b16 %v1301
    %v1317 = vpack.c.b16 %v1314, %v1313
    %v1318 = vpack.c.b16 %v1316, %v1315
    %v1322 = vsel %vm99, %v1297, 0
    %1324 = vmatprep.subr.bf16.mxu0 0
    %1325 = vmatpush1.bf16.msra.mxu0 0
    %1326 = vmatprep.subr.bf16.mxu0 0
    %1327 = vmatpush1.bf16.msra.mxu0 0
    %1328 = vmatprep.subr.bf16.mxu0 0
    %1329 = vmatpush1.bf16.msra.mxu0 0
    %1330 = vmatprep.subr.bf16.mxu0 0
    %1331 = vmatpush1.bf16.msra.mxu0 0
    %1332 = vmatprep.subr.bf16.mxu0 0
    %1333 = vmatpush1.bf16.msra.mxu0 0
    %1334 = vmatprep.subr.bf16.mxu0 0
    %1335 = vmatpush1.bf16.msra.mxu0 0
    %1336 = vmatprep.subr.bf16.mxu0 0
    %1337 = vmatpush1.bf16.msra.mxu0 %v1318
    %1338 = vmatprep.subr.bf16.mxu0 0
    %1339 = vmatpush1.bf16.msra.mxu0 %v1317
    %1340 = vmatprep.subr.bf16.mxu0 0
    %1341 = vmatpush2.bf16.msra.mxu0 0
    %1342 = vmatprep.subr.bf16.mxu0 0
    %1343 = vmatpush2.bf16.msra.mxu0 0
    %1344 = vmatprep.subr.bf16.mxu0 0
    %1345 = vmatpush2.bf16.msra.mxu0 0
    %1346 = vmatprep.subr.bf16.mxu0 0
    %1347 = vmatpush2.bf16.msra.mxu0 0
    %1348 = vmatprep.subr.bf16.mxu0 0
    %1349 = vmatpush2.bf16.msra.mxu0 0
    %1350 = vmatprep.subr.bf16.mxu0 0
    %1351 = vmatpush2.bf16.msra.mxu0 0
    %1352 = vmatprep.subr.bf16.mxu0 0
    %1353 = vmatpush2.bf16.msra.mxu0 0
    %1354 = vmatprep.subr.bf16.mxu0 0
    %1355 = vmatpush2.bf16.msra.mxu0 0
    %1356 = vmatprep.mubr.bf16.mxu0 0
    %1357 = vmatmul.mubr.bf16.gmra.mxu0 %v1322
    %v1358 = vpop.f32.mrf.mxu0
    %v1359 = vadd.f32 %v1307, %v1358
    %v1360 = vpop.f32.mrf.mxu0
    %v1361 = vpop.f32.mrf.mxu0
    %v1362 = vadd.f32 %v1307, %v1361
    %v1363 = vpop.f32.mrf.mxu0
    %1364 = vdwg.mxu0
    %v1365 = vmax.f32 %v1359, 0.0
    %v1366 = vmax.f32 %v1362, 0.0
    %v1367 = vpack.c.bf16 %v1366, %v1365
    %v1368 = vld [vmem:[%s11] sm:$0xf]
    %v1369 = vld [vmem:[%s11 + $0x4] sm:$0xf]
    %v1370 = vld [vmem:[%s11 + $0x8] sm:$0xf]
    %v1371 = vld [vmem:[%s11 + $0xc] sm:$0xf]
    %v1372 = vld [vmem:[%s11 + $0x10] sm:$0xf]
    %v1373 = vld [vmem:[%s11 + $0x14] sm:$0xf]
    %v1374 = vld [vmem:[%s11 + $0x18] sm:$0xf]
    %v1375 = vld [vmem:[%s11 + $0x1c] sm:$0xf]
    %v1376 = vld [vmem:[%s12] sm:$0x1]
    %v1378 = vlaneseq
    %v1379 = vshrl.u32 %v1378, 7
    %v1380 = vsub.s32 0, %v1379
    %v1381 = vrot.slane %v1376, %v1380
    %v1391 = vunpack.c.l.b16 %v1368
    %v1392 = vunpack.c.l.b16 %v1369
    %v1393 = vunpack.c.l.b16 %v1370
    %v1394 = vunpack.c.l.b16 %v1371
    %v1395 = vunpack.c.l.b16 %v1372
    %v1396 = vunpack.c.l.b16 %v1373
    %v1397 = vunpack.c.l.b16 %v1374
    %v1398 = vunpack.c.l.b16 %v1375
    %v1399 = vpack.c.b16 %v1392, %v1391
    %v1400 = vpack.c.b16 %v1394, %v1393
    %v1401 = vpack.c.b16 %v1396, %v1395
    %v1402 = vpack.c.b16 %v1398, %v1397
    %vm1407 = vcmask 523264
    %v1409 = vsel %vm1407, %v1367, 0
    %1411 = vmatprep.subr.bf16.mxu0 0
    %1412 = vmatpush1.bf16.msra.mxu0 0
    %1413 = vmatprep.subr.bf16.mxu0 0
    %1414 = vmatpush1.bf16.msra.mxu0 0
    %1415 = vmatprep.subr.bf16.mxu0 0
    %1416 = vmatpush1.bf16.msra.mxu0 0
    %1417 = vmatprep.subr.bf16.mxu0 0
    %1418 = vmatpush1.bf16.msra.mxu0 0
    %1419 = vmatprep.subr.bf16.mxu0 0
    %1420 = vmatpush1.bf16.msra.mxu0 %v1402
    %1421 = vmatprep.subr.bf16.mxu0 0
    %1422 = vmatpush1.bf16.msra.mxu0 %v1401
    %1423 = vmatprep.subr.bf16.mxu0 0
    %1424 = vmatpush1.bf16.msra.mxu0 %v1400
    %1425 = vmatprep.subr.bf16.mxu0 0
    %1426 = vmatpush1.bf16.msra.mxu0 %v1399
    %1427 = vmatprep.subr.bf16.mxu0 0
    %1428 = vmatpush2.bf16.msra.mxu0 0
    %1429 = vmatprep.subr.bf16.mxu0 0
    %1430 = vmatpush2.bf16.msra.mxu0 0
    %1431 = vmatprep.subr.bf16.mxu0 0
    %1432 = vmatpush2.bf16.msra.mxu0 0
    %1433 = vmatprep.subr.bf16.mxu0 0
    %1434 = vmatpush2.bf16.msra.mxu0 0
    %1435 = vmatprep.subr.bf16.mxu0 0
    %1436 = vmatpush2.bf16.msra.mxu0 0
    %1437 = vmatprep.subr.bf16.mxu0 0
    %1438 = vmatpush2.bf16.msra.mxu0 0
    %1439 = vmatprep.subr.bf16.mxu0 0
    %1440 = vmatpush2.bf16.msra.mxu0 0
    %1441 = vmatprep.subr.bf16.mxu0 0
    %1442 = vmatpush2.bf16.msra.mxu0 0
    %1443 = vmatprep.mubr.bf16.mxu0 0
    %1444 = vmatmul.mubr.bf16.gmra.mxu0 %v1409
    %v1445 = vpop.f32.mrf.mxu0
    %v1446 = vadd.f32 %v1381, %v1445
    %v1447 = vpop.f32.mrf.mxu0
    %v1448 = vpop.f32.mrf.mxu0
    %v1449 = vadd.f32 %v1381, %v1448
    %v1450 = vpop.f32.mrf.mxu0
    %1451 = vdwg.mxu0
    %v1452 = vadd.f32 %v1251, %v1446
    %v1453 = vadd.f32 %v1252, %v1449
    %1454 = vst.msk [vmem:[#allocation10] sm:$0xff] %vm99, %v1452
    %1455 = vst.msk [vmem:[#allocation10 + $0x8] sm:$0xff] %vm99, %v1453
    // Predicated region
    $region70: #{tpu_custom_call.1} parent=1 // pred_check
      _
    $region71: #{tpu_custom_call.1} parent=1 // pred_check_branch
      %1457 = sbr.rel (0) target = $region73
    $region72: #{tpu_custom_call.1} parent=1 // pred_region
      %s1459 = ssub.s32 256, 256
      %1460 = vsyncadd [#allocation4], %s1459
      %s1461 = sshll.u32 [#allocation10], 4
      %s1462 = int_to_ptr.vmem [resolvable:$true] %s1461
      %1467 = dma.vmem_to_hbm [thread:$0]  %s1462, 256, %s13, [#allocation4], 128, 128, 8
    $region73: #{tpu_custom_call.1} parent=1 // pred_fallthru
      _
    // Predicated region
    $region74: #{tpu_custom_call.1} parent=1 // pred_check
      _
    $region75: #{tpu_custom_call.1} parent=1 // pred_check_branch
      %1469 = sbr.rel (0) target = $region77
    $region76: #{tpu_custom_call.1} parent=1 // pred_region
      %1470 = dma.done [#allocation4], 256
    $region77: #{tpu_custom_call.1} parent=1 // pred_fallthru
      _
    %1471 = vsyncpa [#allocation3], 1
    %1472 = vsyncpa [#allocation6], 1
    %1473 = vsyncpa [#allocation9], 1
    %1474 = vsyncpa [#allocation4], 1

</llo_original>
